<compile_context>
chip_gen: v5e
topology: v5e:2x2
jax: 0.10.0
libtpu: 0.0.40
codegen_flags: <defaults>
</compile_context>

<pallas_src>
import functools
import math

import jax
import jax.numpy as jnp
from jax import lax
from jax.experimental import pallas as pl
from jax.experimental.pallas import tpu as pltpu


def _round_up(x, m):
    return (x + m - 1) // m * m


# Budget for the *pipelined* (double-buffered) gx/out blocks, kept well under the
# smallest per-generation VMEM (v7x: 64 MiB physical; v5e: 16 MiB scoped default,
# raised explicitly via vmem_limit_bytes below).
_PIPELINE_VMEM_BUDGET = 32 * 1024 * 1024
_VMEM_LIMIT_BYTES = 48 * 1024 * 1024


def _lstm_kernel(gx_ref, whh_ref, out_ref, hn_ref, cn_ref, h_sc, c_sc,
                 *, hidden_pad, t_block, seq_len, unroll):
    """Recurrent part only: gates = gates_x[t] + h @ W_hh^T (per-gate lane-aligned)."""
    tb = pl.program_id(1)                       # time-block index (innermost, "arbitrary")
    Hp = hidden_pad
    needs_mask = (seq_len % t_block) != 0       # static Python bool

    # First time block of this batch tile: reset the carried state.
    @pl.when(tb == 0)
    def _():
        h_sc[...] = jnp.zeros_like(h_sc)
        c_sc[...] = jnp.zeros_like(c_sc)

    # Resident recurrent weight, loaded once per grid step (hoisted out of the loop).
    whh = whh_ref[...]

    def step(j, carry):
        h_prev, c_prev = carry                  # carried in vregs, not VMEM scratch

        gx = gx_ref[j]
        if gx.dtype != jnp.float32:
            gx = gx.astype(jnp.float32)
        h_in = h_prev if h_prev.dtype == whh.dtype else h_prev.astype(whh.dtype)

        # (b_tile, 4*Hp): precomputed x-projection + recurrent MXU matmul (f32 acc).
        gates = gx + jnp.dot(h_in, whh, preferred_element_type=jnp.float32)

        i_g = jax.nn.sigmoid(gates[:, 0 * Hp:1 * Hp])
        f_g = jax.nn.sigmoid(gates[:, 1 * Hp:2 * Hp])
        g_g = jnp.tanh(gates[:, 2 * Hp:3 * Hp])
        o_g = jax.nn.sigmoid(gates[:, 3 * Hp:4 * Hp])

        c_new = f_g * c_prev + i_g * g_g
        h_new = o_g * jnp.tanh(c_new)

        if needs_mask:  # only generated when T is not a multiple of t_block
            valid = (tb * t_block + j) < seq_len
            h_new = jnp.where(valid, h_new, h_prev)
            c_new = jnp.where(valid, c_new, c_prev)

        out_ref[j] = h_new
        return (h_new, c_new)

    h_fin, c_fin = lax.fori_loop(0, t_block, step, (h_sc[...], c_sc[...]),
                                 unroll=unroll)

    # Cross-grid-step carry: one scratch store per time block (not per timestep).
    h_sc[...] = h_fin
    c_sc[...] = c_fin

    # Final states written once, on the last time block of each batch tile.
    @pl.when(tb == pl.num_programs(1) - 1)
    def _():
        hn_ref[0] = h_fin
        cn_ref[0] = c_fin


def lstm_pallas(x, w_ih, w_hh, b_ih, b_hh, *, t_block=32,
                storage_dtype=jnp.float32):
    """Single-layer LSTM forward (torch.nn.LSTM semantics, zero initial state).

    x:    (T, B, I) float32  (seq-major, batch_first=False)
    w_ih: (4H, I), w_hh: (4H, H), b_ih/b_hh: (4H,)   gate order i, f, g, o
    Returns (output (T,B,H), (h_n (1,B,H), c_n (1,B,H))).

    Precision: full f32 end-to-end (pre-pass matmul at Precision.HIGHEST; the in-kernel
    recurrent matmul accumulates in f32) to match torch float32 semantics.  Set
    storage_dtype=jnp.bfloat16 to halve the gx HBM stream and resident W_hh footprint
    (gate pre-activations then carry ~bf16 error; loosen tolerances accordingly).
    """
    T, B, I = x.shape
    G, H = w_hh.shape
    assert G == 4 * H and w_ih.shape == (G, I)

    f32 = jnp.float32
    hp = lax.Precision.HIGHEST

    # Lane/sublane-aligned padded sizes.
    H_p = _round_up(H, 128)
    G_p = 4 * H_p
    B_p = _round_up(B, 8)
    # Batch tiling: leading "parallel" grid axis over batch tiles (megacore sharding on
    # multi-TensorCore parts); 256-row tiles keep the MXU M-extent fully occupied.
    b_tile = B_p if B_p <= 256 else 256
    B_p = _round_up(B_p, b_tile)

    # Time blocking, capped by a VMEM budget for the double-buffered gx + out blocks.
    t_block = max(1, min(t_block, T))
    gx_item = jnp.dtype(storage_dtype).itemsize

    def _pipeline_bytes(tb_):
        return 2 * tb_ * b_tile * (G_p * gx_item + H_p * 4)

    while t_block > 1 and _pipeline_bytes(t_block) > _PIPELINE_VMEM_BUDGET:
        t_block //= 2
    T_p = _round_up(T, t_block)

    # ---- Pre-pass (off the serial critical path): one big matmul over all timesteps.
    # Input weights/bias are padded to the gate-aligned layout BEFORE the matmul, so gx
    # is emitted directly in its final (T_p, B_p, 4*H_p) layout (no full-size repack).
    # Padded hidden lanes get zero weights/bias, so they stay exactly 0 and inert.
    w_ih_p = jnp.zeros((4, H_p, I), f32).at[:, :H, :].set(
        w_ih.astype(f32).reshape(4, H, I)).reshape(G_p, I)
    bias_p = jnp.zeros((4, H_p), f32).at[:, :H].set(
        (b_ih + b_hh).astype(f32).reshape(4, H)).reshape(G_p)

    # Pad the (small) input tensor instead of the (large) gates tensor.
    x_p = jnp.zeros((T_p, B_p, I), f32).at[:T, :B].set(x.astype(f32))
    gx_p = (jnp.dot(x_p.reshape(T_p * B_p, I), w_ih_p.T, precision=hp)
            + bias_p).reshape(T_p, B_p, G_p).astype(storage_dtype)

    # ---- W_hh^T with per-gate lane-aligned, zero-padded layout: (H_p, 4*H_p).
    whh_g = jnp.zeros((4, H_p, H_p), f32).at[:, :H, :H].set(
        w_hh.astype(f32).reshape(4, H, H))
    whh_t = jnp.transpose(whh_g, (2, 0, 1)).reshape(H_p, G_p).astype(storage_dtype)

    kernel = functools.partial(
        _lstm_kernel, hidden_pad=H_p, t_block=t_block, seq_len=T,
        unroll=min(8, t_block))

    grid = (B_p // b_tile, T_p // t_block)   # (parallel batch tiles, serial time blocks)

    out_p, hn_p, cn_p = pl.pallas_call(
        kernel,
        out_shape=(
            jax.ShapeDtypeStruct((T_p, B_p, H_p), f32),
            jax.ShapeDtypeStruct((1, B_p, H_p), f32),
            jax.ShapeDtypeStruct((1, B_p, H_p), f32),
        ),
        grid=grid,
        in_specs=[
            pl.BlockSpec((t_block, b_tile, G_p), lambda bt, tb: (tb, bt, 0)),  # gx chunk
            pl.BlockSpec((H_p, G_p), lambda bt, tb: (0, 0)),                   # W_hh^T
        ],
        out_specs=(
            pl.BlockSpec((t_block, b_tile, H_p), lambda bt, tb: (tb, bt, 0)),  # output
            pl.BlockSpec((1, b_tile, H_p), lambda bt, tb: (0, bt, 0)),         # h_n
            pl.BlockSpec((1, b_tile, H_p), lambda bt, tb: (0, bt, 0)),         # c_n
        ),
        scratch_shapes=[
            pltpu.VMEM((b_tile, H_p), f32),     # h carry across time blocks
            pltpu.VMEM((b_tile, H_p), f32),     # c carry across time blocks
        ],
        compiler_params=pltpu.CompilerParams(
            dimension_semantics=("parallel", "arbitrary"),
            vmem_limit_bytes=_VMEM_LIMIT_BYTES,
        ),
    )(gx_p, whh_t)

    out = out_p[:T, :B, :H]
    h_n = hn_p[:, :B, :H]
    c_n = cn_p[:, :B, :H]
    return out, (h_n, c_n)


def lstm_reference(x, w_ih, w_hh, b_ih, b_hh):
    """Pure-JAX reference matching torch.nn.LSTM semantics (single layer, f32)."""
    T, B, I = x.shape
    H = w_hh.shape[1]
    h0 = jnp.zeros((B, H), jnp.float32)
    c0 = jnp.zeros((B, H), jnp.float32)
    hp = lax.Precision.HIGHEST

    def step(carry, xt):
        h, c = carry
        gates = (jnp.dot(xt, w_ih.T, precision=hp) + b_ih
                 + jnp.dot(h, w_hh.T, precision=hp) + b_hh)
        i, f, g, o = jnp.split(gates, 4, axis=-1)
        c_new = jax.nn.sigmoid(f) * c + jax.nn.sigmoid(i) * jnp.tanh(g)
        h_new = jax.nn.sigmoid(o) * jnp.tanh(c_new)
        return (h_new, c_new), h_new

    (h_n, c_n), out = jax.lax.scan(step, (h0, c0), x)
    return out, (h_n[None], c_n[None])


if __name__ == "__main__":
    # Small shapes: seq=8, batch=2, input_size=16, hidden_size=32.
    T, B, I, H = 8, 2, 16, 32
    G = 4 * H

    key = jax.random.PRNGKey(0)
    kx, k1, k2, k3, k4 = jax.random.split(key, 5)

    stdv = 1.0 / math.sqrt(H)  # matches RNNBase.reset_parameters
    x = jax.random.normal(kx, (T, B, I), dtype=jnp.float32)
    w_ih = jax.random.uniform(k1, (G, I), jnp.float32, -stdv, stdv)
    w_hh = jax.random.uniform(k2, (G, H), jnp.float32, -stdv, stdv)
    b_ih = jax.random.uniform(k3, (G,), jnp.float32, -stdv, stdv)
    b_hh = jax.random.uniform(k4, (G,), jnp.float32, -stdv, stdv)

    out, (h_n, c_n) = lstm_pallas(x, w_ih, w_hh, b_ih, b_hh)
    jax.block_until_ready((out, h_n, c_n))

    out_ref, (h_ref, c_ref) = lstm_reference(x, w_ih, w_hh, b_ih, b_hh)
    assert out.shape == (T, B, H) and h_n.shape == (1, B, H) and c_n.shape == (1, B, H)
    assert jnp.allclose(out, out_ref, atol=1e-5, rtol=1e-5)
    assert jnp.allclose(h_n, h_ref, atol=1e-5, rtol=1e-5)
    assert jnp.allclose(c_n, c_ref, atol=1e-5, rtol=1e-5)

    print("KERNEL_OK")
</pallas_src>

<mosaic_0001>
module attributes {stable_mosaic.version = 11 : i64} {
  func.func @_lstm_kernel(%arg0: i32, %arg1: i32, %arg2: memref<8x8x512xf32, #tpu.memory_space<vmem>>, %arg3: memref<128x512xf32, #tpu.memory_space<vmem>>, %arg4: memref<8x8x128xf32, #tpu.memory_space<vmem>>, %arg5: memref<1x8x128xf32, #tpu.memory_space<vmem>>, %arg6: memref<1x8x128xf32, #tpu.memory_space<vmem>>, %arg7: memref<8x128xf32, #tpu.memory_space<vmem>>, %arg8: memref<8x128xf32, #tpu.memory_space<vmem>>) attributes {dimension_semantics = [#tpu.dimension_semantics<parallel>, #tpu.dimension_semantics<arbitrary>], iteration_bounds = array<i64: 1, 1>, scalar_prefetch = 0 : i64, scratch_operands = 2 : i64, tpu.core_type = #tpu.core_type<tc>, window_params = [{transform_indices = @transform_0, window_bounds = array<i64: 8, 8, 512>}, {pipeline_mode = #tpu.pipeline_mode<synchronous>, transform_indices = @transform_1, window_bounds = array<i64: 128, 512>}, {transform_indices = @transform_2, window_bounds = array<i64: 8, 8, 128>}, {transform_indices = @transform_3, window_bounds = array<i64: 1, 8, 128>}, {transform_indices = @transform_4, window_bounds = array<i64: 1, 8, 128>}]} {
    %c0_i32 = arith.constant 0 : i32
    %0 = arith.cmpi eq, %arg1, %c0_i32 : i32
    %1 = arith.extui %0 : i1 to i32
    %c0_i32_0 = arith.constant 0 : i32
    %2 = arith.cmpi ne, %1, %c0_i32_0 : i32
    scf.if %2 {
      %cst_76 = arith.constant 0.000000e+00 : f32
      %283 = vector.broadcast %cst_76 : f32 to vector<8x128xf32>
      %c0_77 = arith.constant 0 : index
      %c0_78 = arith.constant 0 : index
      %284 = vector.load %arg7[%c0_77, %c0_78] : memref<8x128xf32, #tpu.memory_space<vmem>>, vector<8x128xf32>
      tpu.vector_store %arg7[%c0_77, %c0_78], %283 {strides = array<i32>} : memref<8x128xf32, #tpu.memory_space<vmem>>, vector<8x128xf32>,
      %cst_79 = arith.constant 0.000000e+00 : f32
      %285 = vector.broadcast %cst_79 : f32 to vector<8x128xf32>
      %c0_80 = arith.constant 0 : index
      %c0_81 = arith.constant 0 : index
      %286 = vector.load %arg8[%c0_80, %c0_81] : memref<8x128xf32, #tpu.memory_space<vmem>>, vector<8x128xf32>
      tpu.vector_store %arg8[%c0_80, %c0_81], %285 {strides = array<i32>} : memref<8x128xf32, #tpu.memory_space<vmem>>, vector<8x128xf32>,
    } else {
    }
    %c0 = arith.constant 0 : index
    %c0_1 = arith.constant 0 : index
    %3 = vector.load %arg3[%c0, %c0_1] : memref<128x512xf32, #tpu.memory_space<vmem>>, vector<128x512xf32>
    %c0_2 = arith.constant 0 : index
    %c0_3 = arith.constant 0 : index
    %4 = vector.load %arg7[%c0_2, %c0_3] : memref<8x128xf32, #tpu.memory_space<vmem>>, vector<8x128xf32>
    %c0_4 = arith.constant 0 : index
    %c0_5 = arith.constant 0 : index
    %5 = vector.load %arg8[%c0_4, %c0_5] : memref<8x128xf32, #tpu.memory_space<vmem>>, vector<8x128xf32>
    %c0_i32_6 = arith.constant 0 : i32
    %6 = arith.index_cast %c0_i32_6 : i32 to index
    %c0_7 = arith.constant 0 : index
    %c0_8 = arith.constant 0 : index
    %7 = vector.load %arg2[%6, %c0_7, %c0_8] : memref<8x8x512xf32, #tpu.memory_space<vmem>>, vector<1x8x512xf32>
    %8 = vector.shape_cast %7 : vector<1x8x512xf32> to vector<8x512xf32>
    %cst = arith.constant dense<0.000000e+00> : vector<8x512xf32>
    %9 = tpu.matmul %4, %3, %cst {dimension_numbers = #tpu.dot_dimension_numbers<[1], [0], [0], [1], [0, 0, 1, 1], [], []>} : vector<8x128xf32>, vector<128x512xf32>, vector<8x512xf32> -> vector<8x512xf32>
    %10 = arith.addf %8, %9 : vector<8x512xf32>
    %11 = vector.extract_strided_slice %10 {offsets = [0, 0], sizes = [8, 128], strides = [1, 1]} : vector<8x512xf32> to vector<8x128xf32>
    %12 = arith.negf %11 : vector<8x128xf32>
    %13 = math.exp %12 : vector<8x128xf32>
    %cst_9 = arith.constant 1.000000e+00 : f32
    %14 = vector.broadcast %cst_9 : f32 to vector<8x128xf32>
    %15 = arith.addf %14, %13 : vector<8x128xf32>
    %16 = arith.divf %14, %15 : vector<8x128xf32>
    %17 = vector.extract_strided_slice %10 {offsets = [0, 128], sizes = [8, 128], strides = [1, 1]} : vector<8x512xf32> to vector<8x128xf32>
    %18 = arith.negf %17 : vector<8x128xf32>
    %19 = math.exp %18 : vector<8x128xf32>
    %cst_10 = arith.constant 1.000000e+00 : f32
    %20 = vector.broadcast %cst_10 : f32 to vector<8x128xf32>
    %21 = arith.addf %20, %19 : vector<8x128xf32>
    %22 = arith.divf %20, %21 : vector<8x128xf32>
    %23 = vector.extract_strided_slice %10 {offsets = [0, 256], sizes = [8, 128], strides = [1, 1]} : vector<8x512xf32> to vector<8x128xf32>
    %24 = math.tanh %23 : vector<8x128xf32>
    %25 = vector.extract_strided_slice %10 {offsets = [0, 384], sizes = [8, 128], strides = [1, 1]} : vector<8x512xf32> to vector<8x128xf32>
    %26 = arith.negf %25 : vector<8x128xf32>
    %27 = math.exp %26 : vector<8x128xf32>
    %cst_11 = arith.constant 1.000000e+00 : f32
    %28 = vector.broadcast %cst_11 : f32 to vector<8x128xf32>
    %29 = arith.addf %28, %27 : vector<8x128xf32>
    %30 = arith.divf %28, %29 : vector<8x128xf32>
    %31 = arith.mulf %22, %5 : vector<8x128xf32>
    %32 = arith.mulf %16, %24 : vector<8x128xf32>
    %33 = arith.addf %31, %32 : vector<8x128xf32>
    %34 = math.tanh %33 : vector<8x128xf32>
    %35 = arith.mulf %30, %34 : vector<8x128xf32>
    %36 = arith.index_cast %c0_i32_6 : i32 to index
    %c0_12 = arith.constant 0 : index
    %c0_13 = arith.constant 0 : index
    %37 = vector.load %arg4[%36, %c0_12, %c0_13] : memref<8x8x128xf32, #tpu.memory_space<vmem>>, vector<1x8x128xf32>
    %38 = vector.shape_cast %37 : vector<1x8x128xf32> to vector<8x128xf32>
    %39 = vector.shape_cast %35 : vector<8x128xf32> to vector<1x8x128xf32>
    tpu.vector_store %arg4[%36, %c0_12, %c0_13], %39 {strides = array<i32>} : memref<8x8x128xf32, #tpu.memory_space<vmem>>, vector<1x8x128xf32>,
    %c1_i32 = arith.constant 1 : i32
    %40 = arith.index_cast %c1_i32 : i32 to index
    %c0_14 = arith.constant 0 : index
    %c0_15 = arith.constant 0 : index
    %41 = vector.load %arg2[%40, %c0_14, %c0_15] : memref<8x8x512xf32, #tpu.memory_space<vmem>>, vector<1x8x512xf32>
    %42 = vector.shape_cast %41 : vector<1x8x512xf32> to vector<8x512xf32>
    %cst_16 = arith.constant dense<0.000000e+00> : vector<8x512xf32>
    %43 = tpu.matmul %35, %3, %cst_16 {dimension_numbers = #tpu.dot_dimension_numbers<[1], [0], [0], [1], [0, 0, 1, 1], [], []>} : vector<8x128xf32>, vector<128x512xf32>, vector<8x512xf32> -> vector<8x512xf32>
    %44 = arith.addf %42, %43 : vector<8x512xf32>
    %45 = vector.extract_strided_slice %44 {offsets = [0, 0], sizes = [8, 128], strides = [1, 1]} : vector<8x512xf32> to vector<8x128xf32>
    %46 = arith.negf %45 : vector<8x128xf32>
    %47 = math.exp %46 : vector<8x128xf32>
    %cst_17 = arith.constant 1.000000e+00 : f32
    %48 = vector.broadcast %cst_17 : f32 to vector<8x128xf32>
    %49 = arith.addf %48, %47 : vector<8x128xf32>
    %50 = arith.divf %48, %49 : vector<8x128xf32>
    %51 = vector.extract_strided_slice %44 {offsets = [0, 128], sizes = [8, 128], strides = [1, 1]} : vector<8x512xf32> to vector<8x128xf32>
    %52 = arith.negf %51 : vector<8x128xf32>
    %53 = math.exp %52 : vector<8x128xf32>
    %cst_18 = arith.constant 1.000000e+00 : f32
    %54 = vector.broadcast %cst_18 : f32 to vector<8x128xf32>
    %55 = arith.addf %54, %53 : vector<8x128xf32>
    %56 = arith.divf %54, %55 : vector<8x128xf32>
    %57 = vector.extract_strided_slice %44 {offsets = [0, 256], sizes = [8, 128], strides = [1, 1]} : vector<8x512xf32> to vector<8x128xf32>
    %58 = math.tanh %57 : vector<8x128xf32>
    %59 = vector.extract_strided_slice %44 {offsets = [0, 384], sizes = [8, 128], strides = [1, 1]} : vector<8x512xf32> to vector<8x128xf32>
    %60 = arith.negf %59 : vector<8x128xf32>
    %61 = math.exp %60 : vector<8x128xf32>
    %cst_19 = arith.constant 1.000000e+00 : f32
    %62 = vector.broadcast %cst_19 : f32 to vector<8x128xf32>
    %63 = arith.addf %62, %61 : vector<8x128xf32>
    %64 = arith.divf %62, %63 : vector<8x128xf32>
    %65 = arith.mulf %56, %33 : vector<8x128xf32>
    %66 = arith.mulf %50, %58 : vector<8x128xf32>
    %67 = arith.addf %65, %66 : vector<8x128xf32>
    %68 = math.tanh %67 : vector<8x128xf32>
    %69 = arith.mulf %64, %68 : vector<8x128xf32>
    %70 = arith.index_cast %c1_i32 : i32 to index
    %c0_20 = arith.constant 0 : index
    %c0_21 = arith.constant 0 : index
    %71 = vector.load %arg4[%70, %c0_20, %c0_21] : memref<8x8x128xf32, #tpu.memory_space<vmem>>, vector<1x8x128xf32>
    %72 = vector.shape_cast %71 : vector<1x8x128xf32> to vector<8x128xf32>
    %73 = vector.shape_cast %69 : vector<8x128xf32> to vector<1x8x128xf32>
    tpu.vector_store %arg4[%70, %c0_20, %c0_21], %73 {strides = array<i32>} : memref<8x8x128xf32, #tpu.memory_space<vmem>>, vector<1x8x128xf32>,
    %c2_i32 = arith.constant 2 : i32
    %74 = arith.index_cast %c2_i32 : i32 to index
    %c0_22 = arith.constant 0 : index
    %c0_23 = arith.constant 0 : index
    %75 = vector.load %arg2[%74, %c0_22, %c0_23] : memref<8x8x512xf32, #tpu.memory_space<vmem>>, vector<1x8x512xf32>
    %76 = vector.shape_cast %75 : vector<1x8x512xf32> to vector<8x512xf32>
    %cst_24 = arith.constant dense<0.000000e+00> : vector<8x512xf32>
    %77 = tpu.matmul %69, %3, %cst_24 {dimension_numbers = #tpu.dot_dimension_numbers<[1], [0], [0], [1], [0, 0, 1, 1], [], []>} : vector<8x128xf32>, vector<128x512xf32>, vector<8x512xf32> -> vector<8x512xf32>
    %78 = arith.addf %76, %77 : vector<8x512xf32>
    %79 = vector.extract_strided_slice %78 {offsets = [0, 0], sizes = [8, 128], strides = [1, 1]} : vector<8x512xf32> to vector<8x128xf32>
    %80 = arith.negf %79 : vector<8x128xf32>
    %81 = math.exp %80 : vector<8x128xf32>
    %cst_25 = arith.constant 1.000000e+00 : f32
    %82 = vector.broadcast %cst_25 : f32 to vector<8x128xf32>
    %83 = arith.addf %82, %81 : vector<8x128xf32>
    %84 = arith.divf %82, %83 : vector<8x128xf32>
    %85 = vector.extract_strided_slice %78 {offsets = [0, 128], sizes = [8, 128], strides = [1, 1]} : vector<8x512xf32> to vector<8x128xf32>
    %86 = arith.negf %85 : vector<8x128xf32>
    %87 = math.exp %86 : vector<8x128xf32>
    %cst_26 = arith.constant 1.000000e+00 : f32
    %88 = vector.broadcast %cst_26 : f32 to vector<8x128xf32>
    %89 = arith.addf %88, %87 : vector<8x128xf32>
    %90 = arith.divf %88, %89 : vector<8x128xf32>
    %91 = vector.extract_strided_slice %78 {offsets = [0, 256], sizes = [8, 128], strides = [1, 1]} : vector<8x512xf32> to vector<8x128xf32>
    %92 = math.tanh %91 : vector<8x128xf32>
    %93 = vector.extract_strided_slice %78 {offsets = [0, 384], sizes = [8, 128], strides = [1, 1]} : vector<8x512xf32> to vector<8x128xf32>
    %94 = arith.negf %93 : vector<8x128xf32>
    %95 = math.exp %94 : vector<8x128xf32>
    %cst_27 = arith.constant 1.000000e+00 : f32
    %96 = vector.broadcast %cst_27 : f32 to vector<8x128xf32>
    %97 = arith.addf %96, %95 : vector<8x128xf32>
    %98 = arith.divf %96, %97 : vector<8x128xf32>
    %99 = arith.mulf %90, %67 : vector<8x128xf32>
    %100 = arith.mulf %84, %92 : vector<8x128xf32>
    %101 = arith.addf %99, %100 : vector<8x128xf32>
    %102 = math.tanh %101 : vector<8x128xf32>
    %103 = arith.mulf %98, %102 : vector<8x128xf32>
    %104 = arith.index_cast %c2_i32 : i32 to index
    %c0_28 = arith.constant 0 : index
    %c0_29 = arith.constant 0 : index
    %105 = vector.load %arg4[%104, %c0_28, %c0_29] : memref<8x8x128xf32, #tpu.memory_space<vmem>>, vector<1x8x128xf32>
    %106 = vector.shape_cast %105 : vector<1x8x128xf32> to vector<8x128xf32>
    %107 = vector.shape_cast %103 : vector<8x128xf32> to vector<1x8x128xf32>
    tpu.vector_store %arg4[%104, %c0_28, %c0_29], %107 {strides = array<i32>} : memref<8x8x128xf32, #tpu.memory_space<vmem>>, vector<1x8x128xf32>,
    %c3_i32 = arith.constant 3 : i32
    %108 = arith.index_cast %c3_i32 : i32 to index
    %c0_30 = arith.constant 0 : index
    %c0_31 = arith.constant 0 : index
    %109 = vector.load %arg2[%108, %c0_30, %c0_31] : memref<8x8x512xf32, #tpu.memory_space<vmem>>, vector<1x8x512xf32>
    %110 = vector.shape_cast %109 : vector<1x8x512xf32> to vector<8x512xf32>
    %cst_32 = arith.constant dense<0.000000e+00> : vector<8x512xf32>
    %111 = tpu.matmul %103, %3, %cst_32 {dimension_numbers = #tpu.dot_dimension_numbers<[1], [0], [0], [1], [0, 0, 1, 1], [], []>} : vector<8x128xf32>, vector<128x512xf32>, vector<8x512xf32> -> vector<8x512xf32>
    %112 = arith.addf %110, %111 : vector<8x512xf32>
    %113 = vector.extract_strided_slice %112 {offsets = [0, 0], sizes = [8, 128], strides = [1, 1]} : vector<8x512xf32> to vector<8x128xf32>
    %114 = arith.negf %113 : vector<8x128xf32>
    %115 = math.exp %114 : vector<8x128xf32>
    %cst_33 = arith.constant 1.000000e+00 : f32
    %116 = vector.broadcast %cst_33 : f32 to vector<8x128xf32>
    %117 = arith.addf %116, %115 : vector<8x128xf32>
    %118 = arith.divf %116, %117 : vector<8x128xf32>
    %119 = vector.extract_strided_slice %112 {offsets = [0, 128], sizes = [8, 128], strides = [1, 1]} : vector<8x512xf32> to vector<8x128xf32>
    %120 = arith.negf %119 : vector<8x128xf32>
    %121 = math.exp %120 : vector<8x128xf32>
    %cst_34 = arith.constant 1.000000e+00 : f32
    %122 = vector.broadcast %cst_34 : f32 to vector<8x128xf32>
    %123 = arith.addf %122, %121 : vector<8x128xf32>
    %124 = arith.divf %122, %123 : vector<8x128xf32>
    %125 = vector.extract_strided_slice %112 {offsets = [0, 256], sizes = [8, 128], strides = [1, 1]} : vector<8x512xf32> to vector<8x128xf32>
    %126 = math.tanh %125 : vector<8x128xf32>
    %127 = vector.extract_strided_slice %112 {offsets = [0, 384], sizes = [8, 128], strides = [1, 1]} : vector<8x512xf32> to vector<8x128xf32>
    %128 = arith.negf %127 : vector<8x128xf32>
    %129 = math.exp %128 : vector<8x128xf32>
    %cst_35 = arith.constant 1.000000e+00 : f32
    %130 = vector.broadcast %cst_35 : f32 to vector<8x128xf32>
    %131 = arith.addf %130, %129 : vector<8x128xf32>
    %132 = arith.divf %130, %131 : vector<8x128xf32>
    %133 = arith.mulf %124, %101 : vector<8x128xf32>
    %134 = arith.mulf %118, %126 : vector<8x128xf32>
    %135 = arith.addf %133, %134 : vector<8x128xf32>
    %136 = math.tanh %135 : vector<8x128xf32>
    %137 = arith.mulf %132, %136 : vector<8x128xf32>
    %138 = arith.index_cast %c3_i32 : i32 to index
    %c0_36 = arith.constant 0 : index
    %c0_37 = arith.constant 0 : index
    %139 = vector.load %arg4[%138, %c0_36, %c0_37] : memref<8x8x128xf32, #tpu.memory_space<vmem>>, vector<1x8x128xf32>
    %140 = vector.shape_cast %139 : vector<1x8x128xf32> to vector<8x128xf32>
    %141 = vector.shape_cast %137 : vector<8x128xf32> to vector<1x8x128xf32>
    tpu.vector_store %arg4[%138, %c0_36, %c0_37], %141 {strides = array<i32>} : memref<8x8x128xf32, #tpu.memory_space<vmem>>, vector<1x8x128xf32>,
    %c4_i32 = arith.constant 4 : i32
    %142 = arith.index_cast %c4_i32 : i32 to index
    %c0_38 = arith.constant 0 : index
    %c0_39 = arith.constant 0 : index
    %143 = vector.load %arg2[%142, %c0_38, %c0_39] : memref<8x8x512xf32, #tpu.memory_space<vmem>>, vector<1x8x512xf32>
    %144 = vector.shape_cast %143 : vector<1x8x512xf32> to vector<8x512xf32>
    %cst_40 = arith.constant dense<0.000000e+00> : vector<8x512xf32>
    %145 = tpu.matmul %137, %3, %cst_40 {dimension_numbers = #tpu.dot_dimension_numbers<[1], [0], [0], [1], [0, 0, 1, 1], [], []>} : vector<8x128xf32>, vector<128x512xf32>, vector<8x512xf32> -> vector<8x512xf32>
    %146 = arith.addf %144, %145 : vector<8x512xf32>
    %147 = vector.extract_strided_slice %146 {offsets = [0, 0], sizes = [8, 128], strides = [1, 1]} : vector<8x512xf32> to vector<8x128xf32>
    %148 = arith.negf %147 : vector<8x128xf32>
    %149 = math.exp %148 : vector<8x128xf32>
    %cst_41 = arith.constant 1.000000e+00 : f32
    %150 = vector.broadcast %cst_41 : f32 to vector<8x128xf32>
    %151 = arith.addf %150, %149 : vector<8x128xf32>
    %152 = arith.divf %150, %151 : vector<8x128xf32>
    %153 = vector.extract_strided_slice %146 {offsets = [0, 128], sizes = [8, 128], strides = [1, 1]} : vector<8x512xf32> to vector<8x128xf32>
    %154 = arith.negf %153 : vector<8x128xf32>
    %155 = math.exp %154 : vector<8x128xf32>
    %cst_42 = arith.constant 1.000000e+00 : f32
    %156 = vector.broadcast %cst_42 : f32 to vector<8x128xf32>
    %157 = arith.addf %156, %155 : vector<8x128xf32>
    %158 = arith.divf %156, %157 : vector<8x128xf32>
    %159 = vector.extract_strided_slice %146 {offsets = [0, 256], sizes = [8, 128], strides = [1, 1]} : vector<8x512xf32> to vector<8x128xf32>
    %160 = math.tanh %159 : vector<8x128xf32>
    %161 = vector.extract_strided_slice %146 {offsets = [0, 384], sizes = [8, 128], strides = [1, 1]} : vector<8x512xf32> to vector<8x128xf32>
    %162 = arith.negf %161 : vector<8x128xf32>
    %163 = math.exp %162 : vector<8x128xf32>
    %cst_43 = arith.constant 1.000000e+00 : f32
    %164 = vector.broadcast %cst_43 : f32 to vector<8x128xf32>
    %165 = arith.addf %164, %163 : vector<8x128xf32>
    %166 = arith.divf %164, %165 : vector<8x128xf32>
    %167 = arith.mulf %158, %135 : vector<8x128xf32>
    %168 = arith.mulf %152, %160 : vector<8x128xf32>
    %169 = arith.addf %167, %168 : vector<8x128xf32>
    %170 = math.tanh %169 : vector<8x128xf32>
    %171 = arith.mulf %166, %170 : vector<8x128xf32>
    %172 = arith.index_cast %c4_i32 : i32 to index
    %c0_44 = arith.constant 0 : index
    %c0_45 = arith.constant 0 : index
    %173 = vector.load %arg4[%172, %c0_44, %c0_45] : memref<8x8x128xf32, #tpu.memory_space<vmem>>, vector<1x8x128xf32>
    %174 = vector.shape_cast %173 : vector<1x8x128xf32> to vector<8x128xf32>
    %175 = vector.shape_cast %171 : vector<8x128xf32> to vector<1x8x128xf32>
    tpu.vector_store %arg4[%172, %c0_44, %c0_45], %175 {strides = array<i32>} : memref<8x8x128xf32, #tpu.memory_space<vmem>>, vector<1x8x128xf32>,
    %c5_i32 = arith.constant 5 : i32
    %176 = arith.index_cast %c5_i32 : i32 to index
    %c0_46 = arith.constant 0 : index
    %c0_47 = arith.constant 0 : index
    %177 = vector.load %arg2[%176, %c0_46, %c0_47] : memref<8x8x512xf32, #tpu.memory_space<vmem>>, vector<1x8x512xf32>
    %178 = vector.shape_cast %177 : vector<1x8x512xf32> to vector<8x512xf32>
    %cst_48 = arith.constant dense<0.000000e+00> : vector<8x512xf32>
    %179 = tpu.matmul %171, %3, %cst_48 {dimension_numbers = #tpu.dot_dimension_numbers<[1], [0], [0], [1], [0, 0, 1, 1], [], []>} : vector<8x128xf32>, vector<128x512xf32>, vector<8x512xf32> -> vector<8x512xf32>
    %180 = arith.addf %178, %179 : vector<8x512xf32>
    %181 = vector.extract_strided_slice %180 {offsets = [0, 0], sizes = [8, 128], strides = [1, 1]} : vector<8x512xf32> to vector<8x128xf32>
    %182 = arith.negf %181 : vector<8x128xf32>
    %183 = math.exp %182 : vector<8x128xf32>
    %cst_49 = arith.constant 1.000000e+00 : f32
    %184 = vector.broadcast %cst_49 : f32 to vector<8x128xf32>
    %185 = arith.addf %184, %183 : vector<8x128xf32>
    %186 = arith.divf %184, %185 : vector<8x128xf32>
    %187 = vector.extract_strided_slice %180 {offsets = [0, 128], sizes = [8, 128], strides = [1, 1]} : vector<8x512xf32> to vector<8x128xf32>
    %188 = arith.negf %187 : vector<8x128xf32>
    %189 = math.exp %188 : vector<8x128xf32>
    %cst_50 = arith.constant 1.000000e+00 : f32
    %190 = vector.broadcast %cst_50 : f32 to vector<8x128xf32>
    %191 = arith.addf %190, %189 : vector<8x128xf32>
    %192 = arith.divf %190, %191 : vector<8x128xf32>
    %193 = vector.extract_strided_slice %180 {offsets = [0, 256], sizes = [8, 128], strides = [1, 1]} : vector<8x512xf32> to vector<8x128xf32>
    %194 = math.tanh %193 : vector<8x128xf32>
    %195 = vector.extract_strided_slice %180 {offsets = [0, 384], sizes = [8, 128], strides = [1, 1]} : vector<8x512xf32> to vector<8x128xf32>
    %196 = arith.negf %195 : vector<8x128xf32>
    %197 = math.exp %196 : vector<8x128xf32>
    %cst_51 = arith.constant 1.000000e+00 : f32
    %198 = vector.broadcast %cst_51 : f32 to vector<8x128xf32>
    %199 = arith.addf %198, %197 : vector<8x128xf32>
    %200 = arith.divf %198, %199 : vector<8x128xf32>
    %201 = arith.mulf %192, %169 : vector<8x128xf32>
    %202 = arith.mulf %186, %194 : vector<8x128xf32>
    %203 = arith.addf %201, %202 : vector<8x128xf32>
    %204 = math.tanh %203 : vector<8x128xf32>
    %205 = arith.mulf %200, %204 : vector<8x128xf32>
    %206 = arith.index_cast %c5_i32 : i32 to index
    %c0_52 = arith.constant 0 : index
    %c0_53 = arith.constant 0 : index
    %207 = vector.load %arg4[%206, %c0_52, %c0_53] : memref<8x8x128xf32, #tpu.memory_space<vmem>>, vector<1x8x128xf32>
    %208 = vector.shape_cast %207 : vector<1x8x128xf32> to vector<8x128xf32>
    %209 = vector.shape_cast %205 : vector<8x128xf32> to vector<1x8x128xf32>
    tpu.vector_store %arg4[%206, %c0_52, %c0_53], %209 {strides = array<i32>} : memref<8x8x128xf32, #tpu.memory_space<vmem>>, vector<1x8x128xf32>,
    %c6_i32 = arith.constant 6 : i32
    %210 = arith.index_cast %c6_i32 : i32 to index
    %c0_54 = arith.constant 0 : index
    %c0_55 = arith.constant 0 : index
    %211 = vector.load %arg2[%210, %c0_54, %c0_55] : memref<8x8x512xf32, #tpu.memory_space<vmem>>, vector<1x8x512xf32>
    %212 = vector.shape_cast %211 : vector<1x8x512xf32> to vector<8x512xf32>
    %cst_56 = arith.constant dense<0.000000e+00> : vector<8x512xf32>
    %213 = tpu.matmul %205, %3, %cst_56 {dimension_numbers = #tpu.dot_dimension_numbers<[1], [0], [0], [1], [0, 0, 1, 1], [], []>} : vector<8x128xf32>, vector<128x512xf32>, vector<8x512xf32> -> vector<8x512xf32>
    %214 = arith.addf %212, %213 : vector<8x512xf32>
    %215 = vector.extract_strided_slice %214 {offsets = [0, 0], sizes = [8, 128], strides = [1, 1]} : vector<8x512xf32> to vector<8x128xf32>
    %216 = arith.negf %215 : vector<8x128xf32>
    %217 = math.exp %216 : vector<8x128xf32>
    %cst_57 = arith.constant 1.000000e+00 : f32
    %218 = vector.broadcast %cst_57 : f32 to vector<8x128xf32>
    %219 = arith.addf %218, %217 : vector<8x128xf32>
    %220 = arith.divf %218, %219 : vector<8x128xf32>
    %221 = vector.extract_strided_slice %214 {offsets = [0, 128], sizes = [8, 128], strides = [1, 1]} : vector<8x512xf32> to vector<8x128xf32>
    %222 = arith.negf %221 : vector<8x128xf32>
    %223 = math.exp %222 : vector<8x128xf32>
    %cst_58 = arith.constant 1.000000e+00 : f32
    %224 = vector.broadcast %cst_58 : f32 to vector<8x128xf32>
    %225 = arith.addf %224, %223 : vector<8x128xf32>
    %226 = arith.divf %224, %225 : vector<8x128xf32>
    %227 = vector.extract_strided_slice %214 {offsets = [0, 256], sizes = [8, 128], strides = [1, 1]} : vector<8x512xf32> to vector<8x128xf32>
    %228 = math.tanh %227 : vector<8x128xf32>
    %229 = vector.extract_strided_slice %214 {offsets = [0, 384], sizes = [8, 128], strides = [1, 1]} : vector<8x512xf32> to vector<8x128xf32>
    %230 = arith.negf %229 : vector<8x128xf32>
    %231 = math.exp %230 : vector<8x128xf32>
    %cst_59 = arith.constant 1.000000e+00 : f32
    %232 = vector.broadcast %cst_59 : f32 to vector<8x128xf32>
    %233 = arith.addf %232, %231 : vector<8x128xf32>
    %234 = arith.divf %232, %233 : vector<8x128xf32>
    %235 = arith.mulf %226, %203 : vector<8x128xf32>
    %236 = arith.mulf %220, %228 : vector<8x128xf32>
    %237 = arith.addf %235, %236 : vector<8x128xf32>
    %238 = math.tanh %237 : vector<8x128xf32>
    %239 = arith.mulf %234, %238 : vector<8x128xf32>
    %240 = arith.index_cast %c6_i32 : i32 to index
    %c0_60 = arith.constant 0 : index
    %c0_61 = arith.constant 0 : index
    %241 = vector.load %arg4[%240, %c0_60, %c0_61] : memref<8x8x128xf32, #tpu.memory_space<vmem>>, vector<1x8x128xf32>
    %242 = vector.shape_cast %241 : vector<1x8x128xf32> to vector<8x128xf32>
    %243 = vector.shape_cast %239 : vector<8x128xf32> to vector<1x8x128xf32>
    tpu.vector_store %arg4[%240, %c0_60, %c0_61], %243 {strides = array<i32>} : memref<8x8x128xf32, #tpu.memory_space<vmem>>, vector<1x8x128xf32>,
    %c7_i32 = arith.constant 7 : i32
    %244 = arith.index_cast %c7_i32 : i32 to index
    %c0_62 = arith.constant 0 : index
    %c0_63 = arith.constant 0 : index
    %245 = vector.load %arg2[%244, %c0_62, %c0_63] : memref<8x8x512xf32, #tpu.memory_space<vmem>>, vector<1x8x512xf32>
    %246 = vector.shape_cast %245 : vector<1x8x512xf32> to vector<8x512xf32>
    %cst_64 = arith.constant dense<0.000000e+00> : vector<8x512xf32>
    %247 = tpu.matmul %239, %3, %cst_64 {dimension_numbers = #tpu.dot_dimension_numbers<[1], [0], [0], [1], [0, 0, 1, 1], [], []>} : vector<8x128xf32>, vector<128x512xf32>, vector<8x512xf32> -> vector<8x512xf32>
    %248 = arith.addf %246, %247 : vector<8x512xf32>
    %249 = vector.extract_strided_slice %248 {offsets = [0, 0], sizes = [8, 128], strides = [1, 1]} : vector<8x512xf32> to vector<8x128xf32>
    %250 = arith.negf %249 : vector<8x128xf32>
    %251 = math.exp %250 : vector<8x128xf32>
    %cst_65 = arith.constant 1.000000e+00 : f32
    %252 = vector.broadcast %cst_65 : f32 to vector<8x128xf32>
    %253 = arith.addf %252, %251 : vector<8x128xf32>
    %254 = arith.divf %252, %253 : vector<8x128xf32>
    %255 = vector.extract_strided_slice %248 {offsets = [0, 128], sizes = [8, 128], strides = [1, 1]} : vector<8x512xf32> to vector<8x128xf32>
    %256 = arith.negf %255 : vector<8x128xf32>
    %257 = math.exp %256 : vector<8x128xf32>
    %cst_66 = arith.constant 1.000000e+00 : f32
    %258 = vector.broadcast %cst_66 : f32 to vector<8x128xf32>
    %259 = arith.addf %258, %257 : vector<8x128xf32>
    %260 = arith.divf %258, %259 : vector<8x128xf32>
    %261 = vector.extract_strided_slice %248 {offsets = [0, 256], sizes = [8, 128], strides = [1, 1]} : vector<8x512xf32> to vector<8x128xf32>
    %262 = math.tanh %261 : vector<8x128xf32>
    %263 = vector.extract_strided_slice %248 {offsets = [0, 384], sizes = [8, 128], strides = [1, 1]} : vector<8x512xf32> to vector<8x128xf32>
    %264 = arith.negf %263 : vector<8x128xf32>
    %265 = math.exp %264 : vector<8x128xf32>
    %cst_67 = arith.constant 1.000000e+00 : f32
    %266 = vector.broadcast %cst_67 : f32 to vector<8x128xf32>
    %267 = arith.addf %266, %265 : vector<8x128xf32>
    %268 = arith.divf %266, %267 : vector<8x128xf32>
    %269 = arith.mulf %260, %237 : vector<8x128xf32>
    %270 = arith.mulf %254, %262 : vector<8x128xf32>
    %271 = arith.addf %269, %270 : vector<8x128xf32>
    %272 = math.tanh %271 : vector<8x128xf32>
    %273 = arith.mulf %268, %272 : vector<8x128xf32>
    %274 = arith.index_cast %c7_i32 : i32 to index
    %c0_68 = arith.constant 0 : index
    %c0_69 = arith.constant 0 : index
    %275 = vector.load %arg4[%274, %c0_68, %c0_69] : memref<8x8x128xf32, #tpu.memory_space<vmem>>, vector<1x8x128xf32>
    %276 = vector.shape_cast %275 : vector<1x8x128xf32> to vector<8x128xf32>
    %277 = vector.shape_cast %273 : vector<8x128xf32> to vector<1x8x128xf32>
    tpu.vector_store %arg4[%274, %c0_68, %c0_69], %277 {strides = array<i32>} : memref<8x8x128xf32, #tpu.memory_space<vmem>>, vector<1x8x128xf32>,
    %c8_i32 = arith.constant 8 : i32
    %c0_70 = arith.constant 0 : index
    %c0_71 = arith.constant 0 : index
    %278 = vector.load %arg7[%c0_70, %c0_71] : memref<8x128xf32, #tpu.memory_space<vmem>>, vector<8x128xf32>
    tpu.vector_store %arg7[%c0_70, %c0_71], %273 {strides = array<i32>} : memref<8x128xf32, #tpu.memory_space<vmem>>, vector<8x128xf32>,
    %c0_72 = arith.constant 0 : index
    %c0_73 = arith.constant 0 : index
    %279 = vector.load %arg8[%c0_72, %c0_73] : memref<8x128xf32, #tpu.memory_space<vmem>>, vector<8x128xf32>
    tpu.vector_store %arg8[%c0_72, %c0_73], %271 {strides = array<i32>} : memref<8x128xf32, #tpu.memory_space<vmem>>, vector<8x128xf32>,
    %c0_i32_74 = arith.constant 0 : i32
    %280 = arith.cmpi eq, %arg1, %c0_i32_74 : i32
    %281 = arith.extui %280 : i1 to i32
    %c0_i32_75 = arith.constant 0 : i32
    %282 = arith.cmpi ne, %281, %c0_i32_75 : i32
    scf.if %282 {
      %c0_76 = arith.constant 0 : index
      %c0_77 = arith.constant 0 : index
      %c0_78 = arith.constant 0 : index
      %283 = vector.load %arg5[%c0_76, %c0_77, %c0_78] : memref<1x8x128xf32, #tpu.memory_space<vmem>>, vector<1x8x128xf32>
      %284 = vector.shape_cast %283 : vector<1x8x128xf32> to vector<8x128xf32>
      %285 = vector.shape_cast %273 : vector<8x128xf32> to vector<1x8x128xf32>
      tpu.vector_store %arg5[%c0_76, %c0_77, %c0_78], %285 {strides = array<i32>} : memref<1x8x128xf32, #tpu.memory_space<vmem>>, vector<1x8x128xf32>,
      %c0_79 = arith.constant 0 : index
      %c0_80 = arith.constant 0 : index
      %c0_81 = arith.constant 0 : index
      %286 = vector.load %arg6[%c0_79, %c0_80, %c0_81] : memref<1x8x128xf32, #tpu.memory_space<vmem>>, vector<1x8x128xf32>
      %287 = vector.shape_cast %286 : vector<1x8x128xf32> to vector<8x128xf32>
      %288 = vector.shape_cast %271 : vector<8x128xf32> to vector<1x8x128xf32>
      tpu.vector_store %arg6[%c0_79, %c0_80, %c0_81], %288 {strides = array<i32>} : memref<1x8x128xf32, #tpu.memory_space<vmem>>, vector<1x8x128xf32>,
    } else {
    }
    return
  }
  func.func @transform_0(%arg0: i32, %arg1: i32) -> (i32, i32, i32) {
    %c0_i32 = arith.constant 0 : i32
    %c0_i32_0 = arith.constant 0 : i32
    return %arg1, %arg0, %c0_i32 : i32, i32, i32
  }
  func.func @transform_1(%arg0: i32, %arg1: i32) -> (i32, i32) {
    %c0_i32 = arith.constant 0 : i32
    %c0_i32_0 = arith.constant 0 : i32
    %c0_i32_1 = arith.constant 0 : i32
    return %c0_i32, %c0_i32_0 : i32, i32
  }
  func.func @transform_2(%arg0: i32, %arg1: i32) -> (i32, i32, i32) {
    %c0_i32 = arith.constant 0 : i32
    %c0_i32_0 = arith.constant 0 : i32
    return %arg1, %arg0, %c0_i32 : i32, i32, i32
  }
  func.func @transform_3(%arg0: i32, %arg1: i32) -> (i32, i32, i32) {
    %c0_i32 = arith.constant 0 : i32
    %c0_i32_0 = arith.constant 0 : i32
    %c0_i32_1 = arith.constant 0 : i32
    return %c0_i32, %arg0, %c0_i32_0 : i32, i32, i32
  }
  func.func @transform_4(%arg0: i32, %arg1: i32) -> (i32, i32, i32) {
    %c0_i32 = arith.constant 0 : i32
    %c0_i32_0 = arith.constant 0 : i32
    %c0_i32_1 = arith.constant 0 : i32
    return %c0_i32, %arg0, %c0_i32_0 : i32, i32, i32
  }
}

</mosaic_0001>

<llo_original>
// kernel: tpu_custom_call.1
$region0: #{tpu_custom_call.1}
  #allocation0 [shape = 'u32[]', space=smem, size = 0x4, offset = 0x4, fixed_abs, tag = 'smem constant byte address 0x4 - core index']
  #allocation1 [shape = 'u32[72,128]{1,0:T(1,128)}', space=vmem, size = 0x9000, scoped, tag = 'internal scratch']
  #allocation2 [shape = 'f32[8,128]{1,0:T(8,128)}', space=vmem, size = 0x1000, scoped, tag = 'scratch operand']
  #allocation3 [shape = 'f32[8,128]{1,0:T(8,128)}', space=vmem, size = 0x1000, scoped, tag = 'scratch operand']
  %s0 = inlined_call_operand.hbm [shape: f32[8,8,512], index: 0, kind: input, shape index: {}]
  %s1 = inlined_call_operand.hbm [shape: f32[128,512], index: 1, kind: input, shape index: {}]
  %s2 = inlined_call_operand.hbm [shape: f32[8,8,128], index: 2, kind: output, shape index: {0}]
  %s3 = inlined_call_operand.hbm [shape: f32[1,8,128], index: 3, kind: output, shape index: {1}]
  %s4 = inlined_call_operand.hbm [shape: f32[1,8,128], index: 4, kind: output, shape index: {2}]
  %5 = xla_tuple %s2, %s3, %s4
  %s6 = sld [smem:[#allocation0]]
  $region50: #{tpu_custom_call.1} parent=0
    _
  %s8 = ssub.s32 1, %s6
  %s9 = scalar_select 0, %s8, %s6
  $region1: #{tpu_custom_call.1} parent=0
    #allocation4 [shape = 'u8[131072]{0}', space=vmem, size = 0x20000, scoped, tag = 'input window, operand 0, single buffered']
    #allocation5 [shape = 's32[1]{0}', space=sflag, size = 0x4, scoped, tag = 'scoped memory for tpu_custom_call.1']
    #allocation6 [shape = 's32[1]{0}', space=sflag, size = 0x4, scoped, tag = 'scoped memory for tpu_custom_call.1']
    #allocation7 [shape = 'u8[262144]{0}', space=vmem, size = 0x40000, scoped, tag = 'input window, operand 1, single buffered']
    #allocation8 [shape = 's32[1]{0}', space=sflag, size = 0x4, scoped, tag = 'scoped memory for tpu_custom_call.1']
    #allocation9 [shape = 'u8[32768]{0}', space=vmem, size = 0x8000, scoped, tag = 'output window, operand 0, single buffered']
    #allocation10 [shape = 'u8[4096]{0}', space=vmem, size = 0x1000, scoped, tag = 'output window, operand 1, single buffered']
    #allocation11 [shape = 's32[1]{0}', space=sflag, size = 0x4, scoped, tag = 'scoped memory for tpu_custom_call.1']
    #allocation12 [shape = 'u8[4096]{0}', space=vmem, size = 0x1000, scoped, tag = 'output window, operand 2, single buffered']
    %10 = vsyncpa [#allocation5], 0
    %11 = vsyncpa [#allocation8], 0
    %12 = vsyncpa [#allocation6], 0
    %13 = vsyncpa [#allocation11], 0
    // Predicated region
    $region2: #{tpu_custom_call.1} parent=1 // pred_check
      _
    $region3: #{tpu_custom_call.1} parent=1 // pred_check_branch
      %15 = sbr.rel (0) target = $region5
    $region4: #{tpu_custom_call.1} parent=1 // pred_region
      %17 = vsyncadd [#allocation5], 0
      %s18 = sshll.u32 %s0, 4
      %s19 = int_to_ptr.hbm [resolvable:$true] %s18
      %s20 = sshll.u32 [#allocation4], 4
      %s21 = int_to_ptr.vmem [resolvable:$true] %s20
      %26 = dma.hbm_to_vmem [thread:$0]  %s19, 4096, %s21, [#allocation5], 512, 512, 32
    $region5: #{tpu_custom_call.1} parent=1 // pred_fallthru
      _
    // Predicated region
    $region6: #{tpu_custom_call.1} parent=1 // pred_check
      _
    $region7: #{tpu_custom_call.1} parent=1 // pred_check_branch
      %28 = sbr.rel (0) target = $region9
    $region8: #{tpu_custom_call.1} parent=1 // pred_region
      %30 = vsyncadd [#allocation8], 0
      %s31 = sshll.u32 %s1, 4
      %s32 = int_to_ptr.hbm [resolvable:$true] %s31
      %s33 = sshll.u32 [#allocation7], 4
      %s34 = int_to_ptr.vmem [resolvable:$true] %s33
      %39 = dma.hbm_to_vmem [thread:$0]  %s32, 8192, %s34, [#allocation8], 512, 512, 32
    $region9: #{tpu_custom_call.1} parent=1 // pred_fallthru
      _
    // Predicated region
    $region10: #{tpu_custom_call.1} parent=1 // pred_check
      _
    $region11: #{tpu_custom_call.1} parent=1 // pred_check_branch
      %41 = sbr.rel (0) target = $region13
    $region12: #{tpu_custom_call.1} parent=1 // pred_region
      %43 = dma.done [#allocation5], 4096
    $region13: #{tpu_custom_call.1} parent=1 // pred_fallthru
      _
    // Predicated region
    $region14: #{tpu_custom_call.1} parent=1 // pred_check
      _
    $region15: #{tpu_custom_call.1} parent=1 // pred_check_branch
      %45 = sbr.rel (0) target = $region17
    $region16: #{tpu_custom_call.1} parent=1 // pred_region
      %47 = dma.done [#allocation8], 8192
    $region17: #{tpu_custom_call.1} parent=1 // pred_fallthru
      _
    %p48 = scmp.eq.s32.totalorder 0, 0
    // Predicated region
    $region18: #{tpu_custom_call.1} parent=1 // pred_check
      %p49 = pneg %p48
    $region19: #{tpu_custom_call.1} parent=1 // pred_check_branch
      %51 = sbr.rel (%p49) target = $region21
    $region20: #{tpu_custom_call.1} parent=1 // pred_region
      %52 = vst [vmem:[#allocation2] sm:$0xff] 0.0
      %53 = vst [vmem:[#allocation3] sm:$0xff] 0.0
    $region21: #{tpu_custom_call.1} parent=1 // pred_fallthru
      _
    %v54 = vld [vmem:[#allocation7] sm:$0xff]
    %v55 = vld [vmem:[#allocation7 + $0x8] sm:$0xff]
    %v56 = vld [vmem:[#allocation7 + $0x10] sm:$0xff]
    %v57 = vld [vmem:[#allocation7 + $0x18] sm:$0xff]
    %v58 = vld [vmem:[#allocation7 + $0x20] sm:$0xff]
    %v59 = vld [vmem:[#allocation7 + $0x28] sm:$0xff]
    %v60 = vld [vmem:[#allocation7 + $0x30] sm:$0xff]
    %v61 = vld [vmem:[#allocation7 + $0x38] sm:$0xff]
    %v62 = vld [vmem:[#allocation7 + $0x40] sm:$0xff]
    %v63 = vld [vmem:[#allocation7 + $0x48] sm:$0xff]
    %v64 = vld [vmem:[#allocation7 + $0x50] sm:$0xff]
    %v65 = vld [vmem:[#allocation7 + $0x58] sm:$0xff]
    %v66 = vld [vmem:[#allocation7 + $0x60] sm:$0xff]
    %v67 = vld [vmem:[#allocation7 + $0x68] sm:$0xff]
    %v68 = vld [vmem:[#allocation7 + $0x70] sm:$0xff]
    %v69 = vld [vmem:[#allocation7 + $0x78] sm:$0xff]
    %v70 = vld [vmem:[#allocation7 + $0x80] sm:$0xff]
    %v71 = vld [vmem:[#allocation7 + $0x88] sm:$0xff]
    %v72 = vld [vmem:[#allocation7 + $0x90] sm:$0xff]
    %v73 = vld [vmem:[#allocation7 + $0x98] sm:$0xff]
    %v74 = vld [vmem:[#allocation7 + $0xa0] sm:$0xff]
    %v75 = vld [vmem:[#allocation7 + $0xa8] sm:$0xff]
    %v76 = vld [vmem:[#allocation7 + $0xb0] sm:$0xff]
    %v77 = vld [vmem:[#allocation7 + $0xb8] sm:$0xff]
    %v78 = vld [vmem:[#allocation7 + $0xc0] sm:$0xff]
    %v79 = vld [vmem:[#allocation7 + $0xc8] sm:$0xff]
    %v80 = vld [vmem:[#allocation7 + $0xd0] sm:$0xff]
    %v81 = vld [vmem:[#allocation7 + $0xd8] sm:$0xff]
    %v82 = vld [vmem:[#allocation7 + $0xe0] sm:$0xff]
    %v83 = vld [vmem:[#allocation7 + $0xe8] sm:$0xff]
    %v84 = vld [vmem:[#allocation7 + $0xf0] sm:$0xff]
    %v85 = vld [vmem:[#allocation7 + $0xf8] sm:$0xff]
    %v86 = vld [vmem:[#allocation7 + $0x100] sm:$0xff]
    %v87 = vld [vmem:[#allocation7 + $0x108] sm:$0xff]
    %v88 = vld [vmem:[#allocation7 + $0x110] sm:$0xff]
    %v89 = vld [vmem:[#allocation7 + $0x118] sm:$0xff]
    %v90 = vld [vmem:[#allocation7 + $0x120] sm:$0xff]
    %v91 = vld [vmem:[#allocation7 + $0x128] sm:$0xff]
    %v92 = vld [vmem:[#allocation7 + $0x130] sm:$0xff]
    %v93 = vld [vmem:[#allocation7 + $0x138] sm:$0xff]
    %v94 = vld [vmem:[#allocation7 + $0x140] sm:$0xff]
    %v95 = vld [vmem:[#allocation7 + $0x148] sm:$0xff]
    %v96 = vld [vmem:[#allocation7 + $0x150] sm:$0xff]
    %v97 = vld [vmem:[#allocation7 + $0x158] sm:$0xff]
    %v98 = vld [vmem:[#allocation7 + $0x160] sm:$0xff]
    %v99 = vld [vmem:[#allocation7 + $0x168] sm:$0xff]
    %v100 = vld [vmem:[#allocation7 + $0x170] sm:$0xff]
    %v101 = vld [vmem:[#allocation7 + $0x178] sm:$0xff]
    %v102 = vld [vmem:[#allocation7 + $0x180] sm:$0xff]
    %v103 = vld [vmem:[#allocation7 + $0x188] sm:$0xff]
    %v104 = vld [vmem:[#allocation7 + $0x190] sm:$0xff]
    %v105 = vld [vmem:[#allocation7 + $0x198] sm:$0xff]
    %v106 = vld [vmem:[#allocation7 + $0x1a0] sm:$0xff]
    %v107 = vld [vmem:[#allocation7 + $0x1a8] sm:$0xff]
    %v108 = vld [vmem:[#allocation7 + $0x1b0] sm:$0xff]
    %v109 = vld [vmem:[#allocation7 + $0x1b8] sm:$0xff]
    %v110 = vld [vmem:[#allocation7 + $0x1c0] sm:$0xff]
    %v111 = vld [vmem:[#allocation7 + $0x1c8] sm:$0xff]
    %v112 = vld [vmem:[#allocation7 + $0x1d0] sm:$0xff]
    %v113 = vld [vmem:[#allocation7 + $0x1d8] sm:$0xff]
    %v114 = vld [vmem:[#allocation7 + $0x1e0] sm:$0xff]
    %v115 = vld [vmem:[#allocation7 + $0x1e8] sm:$0xff]
    %v116 = vld [vmem:[#allocation7 + $0x1f0] sm:$0xff]
    %v117 = vld [vmem:[#allocation7 + $0x1f8] sm:$0xff]
    %v118 = vld [vmem:[#allocation2] sm:$0xff]
    %v119 = vld [vmem:[#allocation3] sm:$0xff]
    %v120 = vld [vmem:[#allocation4] sm:$0xff]
    %v121 = vld [vmem:[#allocation4 + $0x8] sm:$0xff]
    %v122 = vld [vmem:[#allocation4 + $0x10] sm:$0xff]
    %v123 = vld [vmem:[#allocation4 + $0x18] sm:$0xff]
    %124 = vmatpush.msra.mxu0 %v114
    %125 = vmatpush.msra.mxu0 %v110
    %126 = vmatpush.msra.mxu0 %v106
    %127 = vmatpush.msra.mxu0 %v102
    %128 = vmatpush.msra.mxu0 %v98
    %129 = vmatpush.msra.mxu0 %v94
    %130 = vmatpush.msra.mxu0 %v90
    %131 = vmatpush.msra.mxu0 %v86
    %132 = vmatpush.msra.mxu0 %v82
    %133 = vmatpush.msra.mxu0 %v78
    %134 = vmatpush.msra.mxu0 %v74
    %135 = vmatpush.msra.mxu0 %v70
    %136 = vmatpush.msra.mxu0 %v66
    %137 = vmatpush.msra.mxu0 %v62
    %138 = vmatpush.msra.mxu0 %v58
    %139 = vmatpush.msra.mxu0 %v54
    %140 = vmatmul.f32.gmra.mxu0 %v118
    %v141 = vpop.f32.mrf.mxu0
    %v142 = vadd.f32 0.0, %v141
    %143 = vdwg.mxu0
    %144 = vmatpush.msra.mxu0 %v115
    %145 = vmatpush.msra.mxu0 %v111
    %146 = vmatpush.msra.mxu0 %v107
    %147 = vmatpush.msra.mxu0 %v103
    %148 = vmatpush.msra.mxu0 %v99
    %149 = vmatpush.msra.mxu0 %v95
    %150 = vmatpush.msra.mxu0 %v91
    %151 = vmatpush.msra.mxu0 %v87
    %152 = vmatpush.msra.mxu0 %v83
    %153 = vmatpush.msra.mxu0 %v79
    %154 = vmatpush.msra.mxu0 %v75
    %155 = vmatpush.msra.mxu0 %v71
    %156 = vmatpush.msra.mxu0 %v67
    %157 = vmatpush.msra.mxu0 %v63
    %158 = vmatpush.msra.mxu0 %v59
    %159 = vmatpush.msra.mxu0 %v55
    %160 = vmatmul.f32.gmra.mxu0 %v118
    %v161 = vpop.f32.mrf.mxu0
    %v162 = vadd.f32 0.0, %v161
    %163 = vdwg.mxu0
    %164 = vmatpush.msra.mxu0 %v116
    %165 = vmatpush.msra.mxu0 %v112
    %166 = vmatpush.msra.mxu0 %v108
    %167 = vmatpush.msra.mxu0 %v104
    %168 = vmatpush.msra.mxu0 %v100
    %169 = vmatpush.msra.mxu0 %v96
    %170 = vmatpush.msra.mxu0 %v92
    %171 = vmatpush.msra.mxu0 %v88
    %172 = vmatpush.msra.mxu0 %v84
    %173 = vmatpush.msra.mxu0 %v80
    %174 = vmatpush.msra.mxu0 %v76
    %175 = vmatpush.msra.mxu0 %v72
    %176 = vmatpush.msra.mxu0 %v68
    %177 = vmatpush.msra.mxu0 %v64
    %178 = vmatpush.msra.mxu0 %v60
    %179 = vmatpush.msra.mxu0 %v56
    %180 = vmatmul.f32.gmra.mxu0 %v118
    %v181 = vpop.f32.mrf.mxu0
    %v182 = vadd.f32 0.0, %v181
    %183 = vdwg.mxu0
    %184 = vmatpush.msra.mxu0 %v117
    %185 = vmatpush.msra.mxu0 %v113
    %186 = vmatpush.msra.mxu0 %v109
    %187 = vmatpush.msra.mxu0 %v105
    %188 = vmatpush.msra.mxu0 %v101
    %189 = vmatpush.msra.mxu0 %v97
    %190 = vmatpush.msra.mxu0 %v93
    %191 = vmatpush.msra.mxu0 %v89
    %192 = vmatpush.msra.mxu0 %v85
    %193 = vmatpush.msra.mxu0 %v81
    %194 = vmatpush.msra.mxu0 %v77
    %195 = vmatpush.msra.mxu0 %v73
    %196 = vmatpush.msra.mxu0 %v69
    %197 = vmatpush.msra.mxu0 %v65
    %198 = vmatpush.msra.mxu0 %v61
    %199 = vmatpush.msra.mxu0 %v57
    %200 = vmatmul.f32.gmra.mxu0 %v118
    %v201 = vpop.f32.mrf.mxu0
    %v202 = vadd.f32 0.0, %v201
    %203 = vdwg.mxu0
    %v204 = vadd.f32 %v120, %v142
    %v205 = vadd.f32 %v121, %v162
    %v206 = vadd.f32 %v122, %v182
    %v207 = vadd.f32 %v123, %v202
    %v208 = vxor.u32 %v204, 2147483648
    %v209 = vmul.f32 %v208, 1.442695
    %v210 = vpow.pop %v209
    %v211 = vadd.f32 %v210, 1.0
    %v212 = vrcp.pop %v211
    %v213 = vmul.f32 %v211, %v212
    %v214 = vsub.f32 1.0, %v213
    %v215 = vmul.f32 %v212, %v214
    %v216 = vadd.f32 %v212, %v215
    %vm217 = vweird.f32 %v211
    %vm218 = vweird.f32 %v212
    %vm219 = vmor %vm217, %vm218
    %v220 = vsel %vm219, %v212, %v216
    %v221 = vand.u32 2147483647, %v211
    %vm222 = vcmp.eq.f32.partialorder %v221, 8.507059e+37
    %v223 = vand.u32 %v211, 2147483648
    %v224 = vor.u32 1.1754944e-38, %v223
    %v225 = vsel %vm222, %v224, %v220
    %v226 = vmul.f32 1.0, %v225
    %v227 = vxor.u32 %v205, 2147483648
    %v228 = vmul.f32 %v227, 1.442695
    %v229 = vpow.pop %v228
    %v230 = vadd.f32 %v229, 1.0
    %v231 = vrcp.pop %v230
    %v232 = vmul.f32 %v230, %v231
    %v233 = vsub.f32 1.0, %v232
    %v234 = vmul.f32 %v231, %v233
    %v235 = vadd.f32 %v231, %v234
    %vm236 = vweird.f32 %v230
    %vm237 = vweird.f32 %v231
    %vm238 = vmor %vm236, %vm237
    %v239 = vsel %vm238, %v231, %v235
    %v240 = vand.u32 2147483647, %v230
    %vm241 = vcmp.eq.f32.partialorder %v240, 8.507059e+37
    %v242 = vand.u32 %v230, 2147483648
    %v243 = vor.u32 1.1754944e-38, %v242
    %v244 = vsel %vm241, %v243, %v239
    %v245 = vmul.f32 1.0, %v244
    %v246 = vtanh.pop %v206
    %v247 = vxor.u32 %v207, 2147483648
    %v248 = vmul.f32 %v247, 1.442695
    %v249 = vpow.pop %v248
    %v250 = vadd.f32 %v249, 1.0
    %v251 = vrcp.pop %v250
    %v252 = vmul.f32 %v250, %v251
    %v253 = vsub.f32 1.0, %v252
    %v254 = vmul.f32 %v251, %v253
    %v255 = vadd.f32 %v251, %v254
    %vm256 = vweird.f32 %v250
    %vm257 = vweird.f32 %v251
    %vm258 = vmor %vm256, %vm257
    %v259 = vsel %vm258, %v251, %v255
    %v260 = vand.u32 2147483647, %v250
    %vm261 = vcmp.eq.f32.partialorder %v260, 8.507059e+37
    %v262 = vand.u32 %v250, 2147483648
    %v263 = vor.u32 1.1754944e-38, %v262
    %v264 = vsel %vm261, %v263, %v259
    %v265 = vmul.f32 1.0, %v264
    %v266 = vmul.f32 %v245, %v119
    %v267 = vmul.f32 %v226, %v246
    %v268 = vadd.f32 %v266, %v267
    %v269 = vtanh.pop %v268
    %v270 = vmul.f32 %v265, %v269
    %271 = vst [vmem:[#allocation9] sm:$0xff] %v270
    %s272 = scalar_lea.vmem [#allocation4], 32
    %v273 = vld [vmem:[%s272] sm:$0xff]
    %v274 = vld [vmem:[%s272 + $0x8] sm:$0xff]
    %v275 = vld [vmem:[%s272 + $0x10] sm:$0xff]
    %v276 = vld [vmem:[%s272 + $0x18] sm:$0xff]
    %277 = vmatpush.msra.mxu0 %v114
    %278 = vmatpush.msra.mxu0 %v110
    %279 = vmatpush.msra.mxu0 %v106
    %280 = vmatpush.msra.mxu0 %v102
    %281 = vmatpush.msra.mxu0 %v98
    %282 = vmatpush.msra.mxu0 %v94
    %283 = vmatpush.msra.mxu0 %v90
    %284 = vmatpush.msra.mxu0 %v86
    %285 = vmatpush.msra.mxu0 %v82
    %286 = vmatpush.msra.mxu0 %v78
    %287 = vmatpush.msra.mxu0 %v74
    %288 = vmatpush.msra.mxu0 %v70
    %289 = vmatpush.msra.mxu0 %v66
    %290 = vmatpush.msra.mxu0 %v62
    %291 = vmatpush.msra.mxu0 %v58
    %292 = vmatpush.msra.mxu0 %v54
    %293 = vmatmul.f32.gmra.mxu0 %v270
    %v294 = vpop.f32.mrf.mxu0
    %v295 = vadd.f32 0.0, %v294
    %296 = vdwg.mxu0
    %297 = vmatpush.msra.mxu0 %v115
    %298 = vmatpush.msra.mxu0 %v111
    %299 = vmatpush.msra.mxu0 %v107
    %300 = vmatpush.msra.mxu0 %v103
    %301 = vmatpush.msra.mxu0 %v99
    %302 = vmatpush.msra.mxu0 %v95
    %303 = vmatpush.msra.mxu0 %v91
    %304 = vmatpush.msra.mxu0 %v87
    %305 = vmatpush.msra.mxu0 %v83
    %306 = vmatpush.msra.mxu0 %v79
    %307 = vmatpush.msra.mxu0 %v75
    %308 = vmatpush.msra.mxu0 %v71
    %309 = vmatpush.msra.mxu0 %v67
    %310 = vmatpush.msra.mxu0 %v63
    %311 = vmatpush.msra.mxu0 %v59
    %312 = vmatpush.msra.mxu0 %v55
    %313 = vmatmul.f32.gmra.mxu0 %v270
    %v314 = vpop.f32.mrf.mxu0
    %v315 = vadd.f32 0.0, %v314
    %316 = vdwg.mxu0
    %317 = vmatpush.msra.mxu0 %v116
    %318 = vmatpush.msra.mxu0 %v112
    %319 = vmatpush.msra.mxu0 %v108
    %320 = vmatpush.msra.mxu0 %v104
    %321 = vmatpush.msra.mxu0 %v100
    %322 = vmatpush.msra.mxu0 %v96
    %323 = vmatpush.msra.mxu0 %v92
    %324 = vmatpush.msra.mxu0 %v88
    %325 = vmatpush.msra.mxu0 %v84
    %326 = vmatpush.msra.mxu0 %v80
    %327 = vmatpush.msra.mxu0 %v76
    %328 = vmatpush.msra.mxu0 %v72
    %329 = vmatpush.msra.mxu0 %v68
    %330 = vmatpush.msra.mxu0 %v64
    %331 = vmatpush.msra.mxu0 %v60
    %332 = vmatpush.msra.mxu0 %v56
    %333 = vmatmul.f32.gmra.mxu0 %v270
    %v334 = vpop.f32.mrf.mxu0
    %v335 = vadd.f32 0.0, %v334
    %336 = vdwg.mxu0
    %337 = vmatpush.msra.mxu0 %v117
    %338 = vmatpush.msra.mxu0 %v113
    %339 = vmatpush.msra.mxu0 %v109
    %340 = vmatpush.msra.mxu0 %v105
    %341 = vmatpush.msra.mxu0 %v101
    %342 = vmatpush.msra.mxu0 %v97
    %343 = vmatpush.msra.mxu0 %v93
    %344 = vmatpush.msra.mxu0 %v89
    %345 = vmatpush.msra.mxu0 %v85
    %346 = vmatpush.msra.mxu0 %v81
    %347 = vmatpush.msra.mxu0 %v77
    %348 = vmatpush.msra.mxu0 %v73
    %349 = vmatpush.msra.mxu0 %v69
    %350 = vmatpush.msra.mxu0 %v65
    %351 = vmatpush.msra.mxu0 %v61
    %352 = vmatpush.msra.mxu0 %v57
    %353 = vmatmul.f32.gmra.mxu0 %v270
    %v354 = vpop.f32.mrf.mxu0
    %v355 = vadd.f32 0.0, %v354
    %356 = vdwg.mxu0
    %v357 = vadd.f32 %v273, %v295
    %v358 = vadd.f32 %v274, %v315
    %v359 = vadd.f32 %v275, %v335
    %v360 = vadd.f32 %v276, %v355
    %v361 = vxor.u32 %v357, 2147483648
    %v362 = vmul.f32 %v361, 1.442695
    %v363 = vpow.pop %v362
    %v364 = vadd.f32 %v363, 1.0
    %v365 = vrcp.pop %v364
    %v366 = vmul.f32 %v364, %v365
    %v367 = vsub.f32 1.0, %v366
    %v368 = vmul.f32 %v365, %v367
    %v369 = vadd.f32 %v365, %v368
    %vm370 = vweird.f32 %v364
    %vm371 = vweird.f32 %v365
    %vm372 = vmor %vm370, %vm371
    %v373 = vsel %vm372, %v365, %v369
    %v374 = vand.u32 2147483647, %v364
    %vm375 = vcmp.eq.f32.partialorder %v374, 8.507059e+37
    %v376 = vand.u32 %v364, 2147483648
    %v377 = vor.u32 1.1754944e-38, %v376
    %v378 = vsel %vm375, %v377, %v373
    %v379 = vmul.f32 1.0, %v378
    %v380 = vxor.u32 %v358, 2147483648
    %v381 = vmul.f32 %v380, 1.442695
    %v382 = vpow.pop %v381
    %v383 = vadd.f32 %v382, 1.0
    %v384 = vrcp.pop %v383
    %v385 = vmul.f32 %v383, %v384
    %v386 = vsub.f32 1.0, %v385
    %v387 = vmul.f32 %v384, %v386
    %v388 = vadd.f32 %v384, %v387
    %vm389 = vweird.f32 %v383
    %vm390 = vweird.f32 %v384
    %vm391 = vmor %vm389, %vm390
    %v392 = vsel %vm391, %v384, %v388
    %v393 = vand.u32 2147483647, %v383
    %vm394 = vcmp.eq.f32.partialorder %v393, 8.507059e+37
    %v395 = vand.u32 %v383, 2147483648
    %v396 = vor.u32 1.1754944e-38, %v395
    %v397 = vsel %vm394, %v396, %v392
    %v398 = vmul.f32 1.0, %v397
    %v399 = vtanh.pop %v359
    %v400 = vxor.u32 %v360, 2147483648
    %v401 = vmul.f32 %v400, 1.442695
    %v402 = vpow.pop %v401
    %v403 = vadd.f32 %v402, 1.0
    %v404 = vrcp.pop %v403
    %v405 = vmul.f32 %v403, %v404
    %v406 = vsub.f32 1.0, %v405
    %v407 = vmul.f32 %v404, %v406
    %v408 = vadd.f32 %v404, %v407
    %vm409 = vweird.f32 %v403
    %vm410 = vweird.f32 %v404
    %vm411 = vmor %vm409, %vm410
    %v412 = vsel %vm411, %v404, %v408
    %v413 = vand.u32 2147483647, %v403
    %vm414 = vcmp.eq.f32.partialorder %v413, 8.507059e+37
    %v415 = vand.u32 %v403, 2147483648
    %v416 = vor.u32 1.1754944e-38, %v415
    %v417 = vsel %vm414, %v416, %v412
    %v418 = vmul.f32 1.0, %v417
    %v419 = vmul.f32 %v398, %v268
    %v420 = vmul.f32 %v379, %v399
    %v421 = vadd.f32 %v419, %v420
    %v422 = vtanh.pop %v421
    %v423 = vmul.f32 %v418, %v422
    %s424 = scalar_lea.vmem [#allocation9], 8
    %425 = vst [vmem:[%s424] sm:$0xff] %v423
    %s426 = scalar_lea.vmem [#allocation4], 64
    %v427 = vld [vmem:[%s426] sm:$0xff]
    %v428 = vld [vmem:[%s426 + $0x8] sm:$0xff]
    %v429 = vld [vmem:[%s426 + $0x10] sm:$0xff]
    %v430 = vld [vmem:[%s426 + $0x18] sm:$0xff]
    %431 = vmatpush.msra.mxu0 %v114
    %432 = vmatpush.msra.mxu0 %v110
    %433 = vmatpush.msra.mxu0 %v106
    %434 = vmatpush.msra.mxu0 %v102
    %435 = vmatpush.msra.mxu0 %v98
    %436 = vmatpush.msra.mxu0 %v94
    %437 = vmatpush.msra.mxu0 %v90
    %438 = vmatpush.msra.mxu0 %v86
    %439 = vmatpush.msra.mxu0 %v82
    %440 = vmatpush.msra.mxu0 %v78
    %441 = vmatpush.msra.mxu0 %v74
    %442 = vmatpush.msra.mxu0 %v70
    %443 = vmatpush.msra.mxu0 %v66
    %444 = vmatpush.msra.mxu0 %v62
    %445 = vmatpush.msra.mxu0 %v58
    %446 = vmatpush.msra.mxu0 %v54
    %447 = vmatmul.f32.gmra.mxu0 %v423
    %v448 = vpop.f32.mrf.mxu0
    %v449 = vadd.f32 0.0, %v448
    %450 = vdwg.mxu0
    %451 = vmatpush.msra.mxu0 %v115
    %452 = vmatpush.msra.mxu0 %v111
    %453 = vmatpush.msra.mxu0 %v107
    %454 = vmatpush.msra.mxu0 %v103
    %455 = vmatpush.msra.mxu0 %v99
    %456 = vmatpush.msra.mxu0 %v95
    %457 = vmatpush.msra.mxu0 %v91
    %458 = vmatpush.msra.mxu0 %v87
    %459 = vmatpush.msra.mxu0 %v83
    %460 = vmatpush.msra.mxu0 %v79
    %461 = vmatpush.msra.mxu0 %v75
    %462 = vmatpush.msra.mxu0 %v71
    %463 = vmatpush.msra.mxu0 %v67
    %464 = vmatpush.msra.mxu0 %v63
    %465 = vmatpush.msra.mxu0 %v59
    %466 = vmatpush.msra.mxu0 %v55
    %467 = vmatmul.f32.gmra.mxu0 %v423
    %v468 = vpop.f32.mrf.mxu0
    %v469 = vadd.f32 0.0, %v468
    %470 = vdwg.mxu0
    %471 = vmatpush.msra.mxu0 %v116
    %472 = vmatpush.msra.mxu0 %v112
    %473 = vmatpush.msra.mxu0 %v108
    %474 = vmatpush.msra.mxu0 %v104
    %475 = vmatpush.msra.mxu0 %v100
    %476 = vmatpush.msra.mxu0 %v96
    %477 = vmatpush.msra.mxu0 %v92
    %478 = vmatpush.msra.mxu0 %v88
    %479 = vmatpush.msra.mxu0 %v84
    %480 = vmatpush.msra.mxu0 %v80
    %481 = vmatpush.msra.mxu0 %v76
    %482 = vmatpush.msra.mxu0 %v72
    %483 = vmatpush.msra.mxu0 %v68
    %484 = vmatpush.msra.mxu0 %v64
    %485 = vmatpush.msra.mxu0 %v60
    %486 = vmatpush.msra.mxu0 %v56
    %487 = vmatmul.f32.gmra.mxu0 %v423
    %v488 = vpop.f32.mrf.mxu0
    %v489 = vadd.f32 0.0, %v488
    %490 = vdwg.mxu0
    %491 = vmatpush.msra.mxu0 %v117
    %492 = vmatpush.msra.mxu0 %v113
    %493 = vmatpush.msra.mxu0 %v109
    %494 = vmatpush.msra.mxu0 %v105
    %495 = vmatpush.msra.mxu0 %v101
    %496 = vmatpush.msra.mxu0 %v97
    %497 = vmatpush.msra.mxu0 %v93
    %498 = vmatpush.msra.mxu0 %v89
    %499 = vmatpush.msra.mxu0 %v85
    %500 = vmatpush.msra.mxu0 %v81
    %501 = vmatpush.msra.mxu0 %v77
    %502 = vmatpush.msra.mxu0 %v73
    %503 = vmatpush.msra.mxu0 %v69
    %504 = vmatpush.msra.mxu0 %v65
    %505 = vmatpush.msra.mxu0 %v61
    %506 = vmatpush.msra.mxu0 %v57
    %507 = vmatmul.f32.gmra.mxu0 %v423
    %v508 = vpop.f32.mrf.mxu0
    %v509 = vadd.f32 0.0, %v508
    %510 = vdwg.mxu0
    %v511 = vadd.f32 %v427, %v449
    %v512 = vadd.f32 %v428, %v469
    %v513 = vadd.f32 %v429, %v489
    %v514 = vadd.f32 %v430, %v509
    %v515 = vxor.u32 %v511, 2147483648
    %v516 = vmul.f32 %v515, 1.442695
    %v517 = vpow.pop %v516
    %v518 = vadd.f32 %v517, 1.0
    %v519 = vrcp.pop %v518
    %v520 = vmul.f32 %v518, %v519
    %v521 = vsub.f32 1.0, %v520
    %v522 = vmul.f32 %v519, %v521
    %v523 = vadd.f32 %v519, %v522
    %vm524 = vweird.f32 %v518
    %vm525 = vweird.f32 %v519
    %vm526 = vmor %vm524, %vm525
    %v527 = vsel %vm526, %v519, %v523
    %v528 = vand.u32 2147483647, %v518
    %vm529 = vcmp.eq.f32.partialorder %v528, 8.507059e+37
    %v530 = vand.u32 %v518, 2147483648
    %v531 = vor.u32 1.1754944e-38, %v530
    %v532 = vsel %vm529, %v531, %v527
    %v533 = vmul.f32 1.0, %v532
    %v534 = vxor.u32 %v512, 2147483648
    %v535 = vmul.f32 %v534, 1.442695
    %v536 = vpow.pop %v535
    %v537 = vadd.f32 %v536, 1.0
    %v538 = vrcp.pop %v537
    %v539 = vmul.f32 %v537, %v538
    %v540 = vsub.f32 1.0, %v539
    %v541 = vmul.f32 %v538, %v540
    %v542 = vadd.f32 %v538, %v541
    %vm543 = vweird.f32 %v537
    %vm544 = vweird.f32 %v538
    %vm545 = vmor %vm543, %vm544
    %v546 = vsel %vm545, %v538, %v542
    %v547 = vand.u32 2147483647, %v537
    %vm548 = vcmp.eq.f32.partialorder %v547, 8.507059e+37
    %v549 = vand.u32 %v537, 2147483648
    %v550 = vor.u32 1.1754944e-38, %v549
    %v551 = vsel %vm548, %v550, %v546
    %v552 = vmul.f32 1.0, %v551
    %v553 = vtanh.pop %v513
    %v554 = vxor.u32 %v514, 2147483648
    %v555 = vmul.f32 %v554, 1.442695
    %v556 = vpow.pop %v555
    %v557 = vadd.f32 %v556, 1.0
    %v558 = vrcp.pop %v557
    %v559 = vmul.f32 %v557, %v558
    %v560 = vsub.f32 1.0, %v559
    %v561 = vmul.f32 %v558, %v560
    %v562 = vadd.f32 %v558, %v561
    %vm563 = vweird.f32 %v557
    %vm564 = vweird.f32 %v558
    %vm565 = vmor %vm563, %vm564
    %v566 = vsel %vm565, %v558, %v562
    %v567 = vand.u32 2147483647, %v557
    %vm568 = vcmp.eq.f32.partialorder %v567, 8.507059e+37
    %v569 = vand.u32 %v557, 2147483648
    %v570 = vor.u32 1.1754944e-38, %v569
    %v571 = vsel %vm568, %v570, %v566
    %v572 = vmul.f32 1.0, %v571
    %v573 = vmul.f32 %v552, %v421
    %v574 = vmul.f32 %v533, %v553
    %v575 = vadd.f32 %v573, %v574
    %v576 = vtanh.pop %v575
    %v577 = vmul.f32 %v572, %v576
    %s578 = scalar_lea.vmem [#allocation9], 16
    %579 = vst [vmem:[%s578] sm:$0xff] %v577
    %s580 = scalar_lea.vmem [#allocation4], 96
    %v581 = vld [vmem:[%s580] sm:$0xff]
    %v582 = vld [vmem:[%s580 + $0x8] sm:$0xff]
    %v583 = vld [vmem:[%s580 + $0x10] sm:$0xff]
    %v584 = vld [vmem:[%s580 + $0x18] sm:$0xff]
    %585 = vmatpush.msra.mxu0 %v114
    %586 = vmatpush.msra.mxu0 %v110
    %587 = vmatpush.msra.mxu0 %v106
    %588 = vmatpush.msra.mxu0 %v102
    %589 = vmatpush.msra.mxu0 %v98
    %590 = vmatpush.msra.mxu0 %v94
    %591 = vmatpush.msra.mxu0 %v90
    %592 = vmatpush.msra.mxu0 %v86
    %593 = vmatpush.msra.mxu0 %v82
    %594 = vmatpush.msra.mxu0 %v78
    %595 = vmatpush.msra.mxu0 %v74
    %596 = vmatpush.msra.mxu0 %v70
    %597 = vmatpush.msra.mxu0 %v66
    %598 = vmatpush.msra.mxu0 %v62
    %599 = vmatpush.msra.mxu0 %v58
    %600 = vmatpush.msra.mxu0 %v54
    %601 = vmatmul.f32.gmra.mxu0 %v577
    %v602 = vpop.f32.mrf.mxu0
    %v603 = vadd.f32 0.0, %v602
    %604 = vdwg.mxu0
    %605 = vmatpush.msra.mxu0 %v115
    %606 = vmatpush.msra.mxu0 %v111
    %607 = vmatpush.msra.mxu0 %v107
    %608 = vmatpush.msra.mxu0 %v103
    %609 = vmatpush.msra.mxu0 %v99
    %610 = vmatpush.msra.mxu0 %v95
    %611 = vmatpush.msra.mxu0 %v91
    %612 = vmatpush.msra.mxu0 %v87
    %613 = vmatpush.msra.mxu0 %v83
    %614 = vmatpush.msra.mxu0 %v79
    %615 = vmatpush.msra.mxu0 %v75
    %616 = vmatpush.msra.mxu0 %v71
    %617 = vmatpush.msra.mxu0 %v67
    %618 = vmatpush.msra.mxu0 %v63
    %619 = vmatpush.msra.mxu0 %v59
    %620 = vmatpush.msra.mxu0 %v55
    %621 = vmatmul.f32.gmra.mxu0 %v577
    %v622 = vpop.f32.mrf.mxu0
    %v623 = vadd.f32 0.0, %v622
    %624 = vdwg.mxu0
    %625 = vmatpush.msra.mxu0 %v116
    %626 = vmatpush.msra.mxu0 %v112
    %627 = vmatpush.msra.mxu0 %v108
    %628 = vmatpush.msra.mxu0 %v104
    %629 = vmatpush.msra.mxu0 %v100
    %630 = vmatpush.msra.mxu0 %v96
    %631 = vmatpush.msra.mxu0 %v92
    %632 = vmatpush.msra.mxu0 %v88
    %633 = vmatpush.msra.mxu0 %v84
    %634 = vmatpush.msra.mxu0 %v80
    %635 = vmatpush.msra.mxu0 %v76
    %636 = vmatpush.msra.mxu0 %v72
    %637 = vmatpush.msra.mxu0 %v68
    %638 = vmatpush.msra.mxu0 %v64
    %639 = vmatpush.msra.mxu0 %v60
    %640 = vmatpush.msra.mxu0 %v56
    %641 = vmatmul.f32.gmra.mxu0 %v577
    %v642 = vpop.f32.mrf.mxu0
    %v643 = vadd.f32 0.0, %v642
    %644 = vdwg.mxu0
    %645 = vmatpush.msra.mxu0 %v117
    %646 = vmatpush.msra.mxu0 %v113
    %647 = vmatpush.msra.mxu0 %v109
    %648 = vmatpush.msra.mxu0 %v105
    %649 = vmatpush.msra.mxu0 %v101
    %650 = vmatpush.msra.mxu0 %v97
    %651 = vmatpush.msra.mxu0 %v93
    %652 = vmatpush.msra.mxu0 %v89
    %653 = vmatpush.msra.mxu0 %v85
    %654 = vmatpush.msra.mxu0 %v81
    %655 = vmatpush.msra.mxu0 %v77
    %656 = vmatpush.msra.mxu0 %v73
    %657 = vmatpush.msra.mxu0 %v69
    %658 = vmatpush.msra.mxu0 %v65
    %659 = vmatpush.msra.mxu0 %v61
    %660 = vmatpush.msra.mxu0 %v57
    %661 = vmatmul.f32.gmra.mxu0 %v577
    %v662 = vpop.f32.mrf.mxu0
    %v663 = vadd.f32 0.0, %v662
    %664 = vdwg.mxu0
    %v665 = vadd.f32 %v581, %v603
    %v666 = vadd.f32 %v582, %v623
    %v667 = vadd.f32 %v583, %v643
    %v668 = vadd.f32 %v584, %v663
    %v669 = vxor.u32 %v665, 2147483648
    %v670 = vmul.f32 %v669, 1.442695
    %v671 = vpow.pop %v670
    %v672 = vadd.f32 %v671, 1.0
    %v673 = vrcp.pop %v672
    %v674 = vmul.f32 %v672, %v673
    %v675 = vsub.f32 1.0, %v674
    %v676 = vmul.f32 %v673, %v675
    %v677 = vadd.f32 %v673, %v676
    %vm678 = vweird.f32 %v672
    %vm679 = vweird.f32 %v673
    %vm680 = vmor %vm678, %vm679
    %v681 = vsel %vm680, %v673, %v677
    %v682 = vand.u32 2147483647, %v672
    %vm683 = vcmp.eq.f32.partialorder %v682, 8.507059e+37
    %v684 = vand.u32 %v672, 2147483648
    %v685 = vor.u32 1.1754944e-38, %v684
    %v686 = vsel %vm683, %v685, %v681
    %v687 = vmul.f32 1.0, %v686
    %v688 = vxor.u32 %v666, 2147483648
    %v689 = vmul.f32 %v688, 1.442695
    %v690 = vpow.pop %v689
    %v691 = vadd.f32 %v690, 1.0
    %v692 = vrcp.pop %v691
    %v693 = vmul.f32 %v691, %v692
    %v694 = vsub.f32 1.0, %v693
    %v695 = vmul.f32 %v692, %v694
    %v696 = vadd.f32 %v692, %v695
    %vm697 = vweird.f32 %v691
    %vm698 = vweird.f32 %v692
    %vm699 = vmor %vm697, %vm698
    %v700 = vsel %vm699, %v692, %v696
    %v701 = vand.u32 2147483647, %v691
    %vm702 = vcmp.eq.f32.partialorder %v701, 8.507059e+37
    %v703 = vand.u32 %v691, 2147483648
    %v704 = vor.u32 1.1754944e-38, %v703
    %v705 = vsel %vm702, %v704, %v700
    %v706 = vmul.f32 1.0, %v705
    %v707 = vtanh.pop %v667
    %v708 = vxor.u32 %v668, 2147483648
    %v709 = vmul.f32 %v708, 1.442695
    %v710 = vpow.pop %v709
    %v711 = vadd.f32 %v710, 1.0
    %v712 = vrcp.pop %v711
    %v713 = vmul.f32 %v711, %v712
    %v714 = vsub.f32 1.0, %v713
    %v715 = vmul.f32 %v712, %v714
    %v716 = vadd.f32 %v712, %v715
    %vm717 = vweird.f32 %v711
    %vm718 = vweird.f32 %v712
    %vm719 = vmor %vm717, %vm718
    %v720 = vsel %vm719, %v712, %v716
    %v721 = vand.u32 2147483647, %v711
    %vm722 = vcmp.eq.f32.partialorder %v721, 8.507059e+37
    %v723 = vand.u32 %v711, 2147483648
    %v724 = vor.u32 1.1754944e-38, %v723
    %v725 = vsel %vm722, %v724, %v720
    %v726 = vmul.f32 1.0, %v725
    %v727 = vmul.f32 %v706, %v575
    %v728 = vmul.f32 %v687, %v707
    %v729 = vadd.f32 %v727, %v728
    %v730 = vtanh.pop %v729
    %v731 = vmul.f32 %v726, %v730
    %s732 = scalar_lea.vmem [#allocation9], 24
    %733 = vst [vmem:[%s732] sm:$0xff] %v731
    %s734 = scalar_lea.vmem [#allocation4], 128
    %v735 = vld [vmem:[%s734] sm:$0xff]
    %v736 = vld [vmem:[%s734 + $0x8] sm:$0xff]
    %v737 = vld [vmem:[%s734 + $0x10] sm:$0xff]
    %v738 = vld [vmem:[%s734 + $0x18] sm:$0xff]
    %739 = vmatpush.msra.mxu0 %v114
    %740 = vmatpush.msra.mxu0 %v110
    %741 = vmatpush.msra.mxu0 %v106
    %742 = vmatpush.msra.mxu0 %v102
    %743 = vmatpush.msra.mxu0 %v98
    %744 = vmatpush.msra.mxu0 %v94
    %745 = vmatpush.msra.mxu0 %v90
    %746 = vmatpush.msra.mxu0 %v86
    %747 = vmatpush.msra.mxu0 %v82
    %748 = vmatpush.msra.mxu0 %v78
    %749 = vmatpush.msra.mxu0 %v74
    %750 = vmatpush.msra.mxu0 %v70
    %751 = vmatpush.msra.mxu0 %v66
    %752 = vmatpush.msra.mxu0 %v62
    %753 = vmatpush.msra.mxu0 %v58
    %754 = vmatpush.msra.mxu0 %v54
    %755 = vmatmul.f32.gmra.mxu0 %v731
    %v756 = vpop.f32.mrf.mxu0
    %v757 = vadd.f32 0.0, %v756
    %758 = vdwg.mxu0
    %759 = vmatpush.msra.mxu0 %v115
    %760 = vmatpush.msra.mxu0 %v111
    %761 = vmatpush.msra.mxu0 %v107
    %762 = vmatpush.msra.mxu0 %v103
    %763 = vmatpush.msra.mxu0 %v99
    %764 = vmatpush.msra.mxu0 %v95
    %765 = vmatpush.msra.mxu0 %v91
    %766 = vmatpush.msra.mxu0 %v87
    %767 = vmatpush.msra.mxu0 %v83
    %768 = vmatpush.msra.mxu0 %v79
    %769 = vmatpush.msra.mxu0 %v75
    %770 = vmatpush.msra.mxu0 %v71
    %771 = vmatpush.msra.mxu0 %v67
    %772 = vmatpush.msra.mxu0 %v63
    %773 = vmatpush.msra.mxu0 %v59
    %774 = vmatpush.msra.mxu0 %v55
    %775 = vmatmul.f32.gmra.mxu0 %v731
    %v776 = vpop.f32.mrf.mxu0
    %v777 = vadd.f32 0.0, %v776
    %778 = vdwg.mxu0
    %779 = vmatpush.msra.mxu0 %v116
    %780 = vmatpush.msra.mxu0 %v112
    %781 = vmatpush.msra.mxu0 %v108
    %782 = vmatpush.msra.mxu0 %v104
    %783 = vmatpush.msra.mxu0 %v100
    %784 = vmatpush.msra.mxu0 %v96
    %785 = vmatpush.msra.mxu0 %v92
    %786 = vmatpush.msra.mxu0 %v88
    %787 = vmatpush.msra.mxu0 %v84
    %788 = vmatpush.msra.mxu0 %v80
    %789 = vmatpush.msra.mxu0 %v76
    %790 = vmatpush.msra.mxu0 %v72
    %791 = vmatpush.msra.mxu0 %v68
    %792 = vmatpush.msra.mxu0 %v64
    %793 = vmatpush.msra.mxu0 %v60
    %794 = vmatpush.msra.mxu0 %v56
    %795 = vmatmul.f32.gmra.mxu0 %v731
    %v796 = vpop.f32.mrf.mxu0
    %v797 = vadd.f32 0.0, %v796
    %798 = vdwg.mxu0
    %799 = vmatpush.msra.mxu0 %v117
    %800 = vmatpush.msra.mxu0 %v113
    %801 = vmatpush.msra.mxu0 %v109
    %802 = vmatpush.msra.mxu0 %v105
    %803 = vmatpush.msra.mxu0 %v101
    %804 = vmatpush.msra.mxu0 %v97
    %805 = vmatpush.msra.mxu0 %v93
    %806 = vmatpush.msra.mxu0 %v89
    %807 = vmatpush.msra.mxu0 %v85
    %808 = vmatpush.msra.mxu0 %v81
    %809 = vmatpush.msra.mxu0 %v77
    %810 = vmatpush.msra.mxu0 %v73
    %811 = vmatpush.msra.mxu0 %v69
    %812 = vmatpush.msra.mxu0 %v65
    %813 = vmatpush.msra.mxu0 %v61
    %814 = vmatpush.msra.mxu0 %v57
    %815 = vmatmul.f32.gmra.mxu0 %v731
    %v816 = vpop.f32.mrf.mxu0
    %v817 = vadd.f32 0.0, %v816
    %818 = vdwg.mxu0
    %v819 = vadd.f32 %v735, %v757
    %v820 = vadd.f32 %v736, %v777
    %v821 = vadd.f32 %v737, %v797
    %v822 = vadd.f32 %v738, %v817
    %v823 = vxor.u32 %v819, 2147483648
    %v824 = vmul.f32 %v823, 1.442695
    %v825 = vpow.pop %v824
    %v826 = vadd.f32 %v825, 1.0
    %v827 = vrcp.pop %v826
    %v828 = vmul.f32 %v826, %v827
    %v829 = vsub.f32 1.0, %v828
    %v830 = vmul.f32 %v827, %v829
    %v831 = vadd.f32 %v827, %v830
    %vm832 = vweird.f32 %v826
    %vm833 = vweird.f32 %v827
    %vm834 = vmor %vm832, %vm833
    %v835 = vsel %vm834, %v827, %v831
    %v836 = vand.u32 2147483647, %v826
    %vm837 = vcmp.eq.f32.partialorder %v836, 8.507059e+37
    %v838 = vand.u32 %v826, 2147483648
    %v839 = vor.u32 1.1754944e-38, %v838
    %v840 = vsel %vm837, %v839, %v835
    %v841 = vmul.f32 1.0, %v840
    %v842 = vxor.u32 %v820, 2147483648
    %v843 = vmul.f32 %v842, 1.442695
    %v844 = vpow.pop %v843
    %v845 = vadd.f32 %v844, 1.0
    %v846 = vrcp.pop %v845
    %v847 = vmul.f32 %v845, %v846
    %v848 = vsub.f32 1.0, %v847
    %v849 = vmul.f32 %v846, %v848
    %v850 = vadd.f32 %v846, %v849
    %vm851 = vweird.f32 %v845
    %vm852 = vweird.f32 %v846
    %vm853 = vmor %vm851, %vm852
    %v854 = vsel %vm853, %v846, %v850
    %v855 = vand.u32 2147483647, %v845
    %vm856 = vcmp.eq.f32.partialorder %v855, 8.507059e+37
    %v857 = vand.u32 %v845, 2147483648
    %v858 = vor.u32 1.1754944e-38, %v857
    %v859 = vsel %vm856, %v858, %v854
    %v860 = vmul.f32 1.0, %v859
    %v861 = vtanh.pop %v821
    %v862 = vxor.u32 %v822, 2147483648
    %v863 = vmul.f32 %v862, 1.442695
    %v864 = vpow.pop %v863
    %v865 = vadd.f32 %v864, 1.0
    %v866 = vrcp.pop %v865
    %v867 = vmul.f32 %v865, %v866
    %v868 = vsub.f32 1.0, %v867
    %v869 = vmul.f32 %v866, %v868
    %v870 = vadd.f32 %v866, %v869
    %vm871 = vweird.f32 %v865
    %vm872 = vweird.f32 %v866
    %vm873 = vmor %vm871, %vm872
    %v874 = vsel %vm873, %v866, %v870
    %v875 = vand.u32 2147483647, %v865
    %vm876 = vcmp.eq.f32.partialorder %v875, 8.507059e+37
    %v877 = vand.u32 %v865, 2147483648
    %v878 = vor.u32 1.1754944e-38, %v877
    %v879 = vsel %vm876, %v878, %v874
    %v880 = vmul.f32 1.0, %v879
    %v881 = vmul.f32 %v860, %v729
    %v882 = vmul.f32 %v841, %v861
    %v883 = vadd.f32 %v881, %v882
    %v884 = vtanh.pop %v883
    %v885 = vmul.f32 %v880, %v884
    %s886 = scalar_lea.vmem [#allocation9], 32
    %887 = vst [vmem:[%s886] sm:$0xff] %v885
    %s888 = scalar_lea.vmem [#allocation4], 160
    %v889 = vld [vmem:[%s888] sm:$0xff]
    %v890 = vld [vmem:[%s888 + $0x8] sm:$0xff]
    %v891 = vld [vmem:[%s888 + $0x10] sm:$0xff]
    %v892 = vld [vmem:[%s888 + $0x18] sm:$0xff]
    %893 = vmatpush.msra.mxu0 %v114
    %894 = vmatpush.msra.mxu0 %v110
    %895 = vmatpush.msra.mxu0 %v106
    %896 = vmatpush.msra.mxu0 %v102
    %897 = vmatpush.msra.mxu0 %v98
    %898 = vmatpush.msra.mxu0 %v94
    %899 = vmatpush.msra.mxu0 %v90
    %900 = vmatpush.msra.mxu0 %v86
    %901 = vmatpush.msra.mxu0 %v82
    %902 = vmatpush.msra.mxu0 %v78
    %903 = vmatpush.msra.mxu0 %v74
    %904 = vmatpush.msra.mxu0 %v70
    %905 = vmatpush.msra.mxu0 %v66
    %906 = vmatpush.msra.mxu0 %v62
    %907 = vmatpush.msra.mxu0 %v58
    %908 = vmatpush.msra.mxu0 %v54
    %909 = vmatmul.f32.gmra.mxu0 %v885
    %v910 = vpop.f32.mrf.mxu0
    %v911 = vadd.f32 0.0, %v910
    %912 = vdwg.mxu0
    %913 = vmatpush.msra.mxu0 %v115
    %914 = vmatpush.msra.mxu0 %v111
    %915 = vmatpush.msra.mxu0 %v107
    %916 = vmatpush.msra.mxu0 %v103
    %917 = vmatpush.msra.mxu0 %v99
    %918 = vmatpush.msra.mxu0 %v95
    %919 = vmatpush.msra.mxu0 %v91
    %920 = vmatpush.msra.mxu0 %v87
    %921 = vmatpush.msra.mxu0 %v83
    %922 = vmatpush.msra.mxu0 %v79
    %923 = vmatpush.msra.mxu0 %v75
    %924 = vmatpush.msra.mxu0 %v71
    %925 = vmatpush.msra.mxu0 %v67
    %926 = vmatpush.msra.mxu0 %v63
    %927 = vmatpush.msra.mxu0 %v59
    %928 = vmatpush.msra.mxu0 %v55
    %929 = vmatmul.f32.gmra.mxu0 %v885
    %v930 = vpop.f32.mrf.mxu0
    %v931 = vadd.f32 0.0, %v930
    %932 = vdwg.mxu0
    %933 = vmatpush.msra.mxu0 %v116
    %934 = vmatpush.msra.mxu0 %v112
    %935 = vmatpush.msra.mxu0 %v108
    %936 = vmatpush.msra.mxu0 %v104
    %937 = vmatpush.msra.mxu0 %v100
    %938 = vmatpush.msra.mxu0 %v96
    %939 = vmatpush.msra.mxu0 %v92
    %940 = vmatpush.msra.mxu0 %v88
    %941 = vmatpush.msra.mxu0 %v84
    %942 = vmatpush.msra.mxu0 %v80
    %943 = vmatpush.msra.mxu0 %v76
    %944 = vmatpush.msra.mxu0 %v72
    %945 = vmatpush.msra.mxu0 %v68
    %946 = vmatpush.msra.mxu0 %v64
    %947 = vmatpush.msra.mxu0 %v60
    %948 = vmatpush.msra.mxu0 %v56
    %949 = vmatmul.f32.gmra.mxu0 %v885
    %v950 = vpop.f32.mrf.mxu0
    %v951 = vadd.f32 0.0, %v950
    %952 = vdwg.mxu0
    %953 = vmatpush.msra.mxu0 %v117
    %954 = vmatpush.msra.mxu0 %v113
    %955 = vmatpush.msra.mxu0 %v109
    %956 = vmatpush.msra.mxu0 %v105
    %957 = vmatpush.msra.mxu0 %v101
    %958 = vmatpush.msra.mxu0 %v97
    %959 = vmatpush.msra.mxu0 %v93
    %960 = vmatpush.msra.mxu0 %v89
    %961 = vmatpush.msra.mxu0 %v85
    %962 = vmatpush.msra.mxu0 %v81
    %963 = vmatpush.msra.mxu0 %v77
    %964 = vmatpush.msra.mxu0 %v73
    %965 = vmatpush.msra.mxu0 %v69
    %966 = vmatpush.msra.mxu0 %v65
    %967 = vmatpush.msra.mxu0 %v61
    %968 = vmatpush.msra.mxu0 %v57
    %969 = vmatmul.f32.gmra.mxu0 %v885
    %v970 = vpop.f32.mrf.mxu0
    %v971 = vadd.f32 0.0, %v970
    %972 = vdwg.mxu0
    %v973 = vadd.f32 %v889, %v911
    %v974 = vadd.f32 %v890, %v931
    %v975 = vadd.f32 %v891, %v951
    %v976 = vadd.f32 %v892, %v971
    %v977 = vxor.u32 %v973, 2147483648
    %v978 = vmul.f32 %v977, 1.442695
    %v979 = vpow.pop %v978
    %v980 = vadd.f32 %v979, 1.0
    %v981 = vrcp.pop %v980
    %v982 = vmul.f32 %v980, %v981
    %v983 = vsub.f32 1.0, %v982
    %v984 = vmul.f32 %v981, %v983
    %v985 = vadd.f32 %v981, %v984
    %vm986 = vweird.f32 %v980
    %vm987 = vweird.f32 %v981
    %vm988 = vmor %vm986, %vm987
    %v989 = vsel %vm988, %v981, %v985
    %v990 = vand.u32 2147483647, %v980
    %vm991 = vcmp.eq.f32.partialorder %v990, 8.507059e+37
    %v992 = vand.u32 %v980, 2147483648
    %v993 = vor.u32 1.1754944e-38, %v992
    %v994 = vsel %vm991, %v993, %v989
    %v995 = vmul.f32 1.0, %v994
    %v996 = vxor.u32 %v974, 2147483648
    %v997 = vmul.f32 %v996, 1.442695
    %v998 = vpow.pop %v997
    %v999 = vadd.f32 %v998, 1.0
    %v1000 = vrcp.pop %v999
    %v1001 = vmul.f32 %v999, %v1000
    %v1002 = vsub.f32 1.0, %v1001
    %v1003 = vmul.f32 %v1000, %v1002
    %v1004 = vadd.f32 %v1000, %v1003
    %vm1005 = vweird.f32 %v999
    %vm1006 = vweird.f32 %v1000
    %vm1007 = vmor %vm1005, %vm1006
    %v1008 = vsel %vm1007, %v1000, %v1004
    %v1009 = vand.u32 2147483647, %v999
    %vm1010 = vcmp.eq.f32.partialorder %v1009, 8.507059e+37
    %v1011 = vand.u32 %v999, 2147483648
    %v1012 = vor.u32 1.1754944e-38, %v1011
    %v1013 = vsel %vm1010, %v1012, %v1008
    %v1014 = vmul.f32 1.0, %v1013
    %v1015 = vtanh.pop %v975
    %v1016 = vxor.u32 %v976, 2147483648
    %v1017 = vmul.f32 %v1016, 1.442695
    %v1018 = vpow.pop %v1017
    %v1019 = vadd.f32 %v1018, 1.0
    %v1020 = vrcp.pop %v1019
    %v1021 = vmul.f32 %v1019, %v1020
    %v1022 = vsub.f32 1.0, %v1021
    %v1023 = vmul.f32 %v1020, %v1022
    %v1024 = vadd.f32 %v1020, %v1023
    %vm1025 = vweird.f32 %v1019
    %vm1026 = vweird.f32 %v1020
    %vm1027 = vmor %vm1025, %vm1026
    %v1028 = vsel %vm1027, %v1020, %v1024
    %v1029 = vand.u32 2147483647, %v1019
    %vm1030 = vcmp.eq.f32.partialorder %v1029, 8.507059e+37
    %v1031 = vand.u32 %v1019, 2147483648
    %v1032 = vor.u32 1.1754944e-38, %v1031
    %v1033 = vsel %vm1030, %v1032, %v1028
    %v1034 = vmul.f32 1.0, %v1033
    %v1035 = vmul.f32 %v1014, %v883
    %v1036 = vmul.f32 %v995, %v1015
    %v1037 = vadd.f32 %v1035, %v1036
    %v1038 = vtanh.pop %v1037
    %v1039 = vmul.f32 %v1034, %v1038
    %s1040 = scalar_lea.vmem [#allocation9], 40
    %1041 = vst [vmem:[%s1040] sm:$0xff] %v1039
    %s1042 = scalar_lea.vmem [#allocation4], 192
    %v1043 = vld [vmem:[%s1042] sm:$0xff]
    %v1044 = vld [vmem:[%s1042 + $0x8] sm:$0xff]
    %v1045 = vld [vmem:[%s1042 + $0x10] sm:$0xff]
    %v1046 = vld [vmem:[%s1042 + $0x18] sm:$0xff]
    %1047 = vmatpush.msra.mxu0 %v114
    %1048 = vmatpush.msra.mxu0 %v110
    %1049 = vmatpush.msra.mxu0 %v106
    %1050 = vmatpush.msra.mxu0 %v102
    %1051 = vmatpush.msra.mxu0 %v98
    %1052 = vmatpush.msra.mxu0 %v94
    %1053 = vmatpush.msra.mxu0 %v90
    %1054 = vmatpush.msra.mxu0 %v86
    %1055 = vmatpush.msra.mxu0 %v82
    %1056 = vmatpush.msra.mxu0 %v78
    %1057 = vmatpush.msra.mxu0 %v74
    %1058 = vmatpush.msra.mxu0 %v70
    %1059 = vmatpush.msra.mxu0 %v66
    %1060 = vmatpush.msra.mxu0 %v62
    %1061 = vmatpush.msra.mxu0 %v58
    %1062 = vmatpush.msra.mxu0 %v54
    %1063 = vmatmul.f32.gmra.mxu0 %v1039
    %v1064 = vpop.f32.mrf.mxu0
    %v1065 = vadd.f32 0.0, %v1064
    %1066 = vdwg.mxu0
    %1067 = vmatpush.msra.mxu0 %v115
    %1068 = vmatpush.msra.mxu0 %v111
    %1069 = vmatpush.msra.mxu0 %v107
    %1070 = vmatpush.msra.mxu0 %v103
    %1071 = vmatpush.msra.mxu0 %v99
    %1072 = vmatpush.msra.mxu0 %v95
    %1073 = vmatpush.msra.mxu0 %v91
    %1074 = vmatpush.msra.mxu0 %v87
    %1075 = vmatpush.msra.mxu0 %v83
    %1076 = vmatpush.msra.mxu0 %v79
    %1077 = vmatpush.msra.mxu0 %v75
    %1078 = vmatpush.msra.mxu0 %v71
    %1079 = vmatpush.msra.mxu0 %v67
    %1080 = vmatpush.msra.mxu0 %v63
    %1081 = vmatpush.msra.mxu0 %v59
    %1082 = vmatpush.msra.mxu0 %v55
    %1083 = vmatmul.f32.gmra.mxu0 %v1039
    %v1084 = vpop.f32.mrf.mxu0
    %v1085 = vadd.f32 0.0, %v1084
    %1086 = vdwg.mxu0
    %1087 = vmatpush.msra.mxu0 %v116
    %1088 = vmatpush.msra.mxu0 %v112
    %1089 = vmatpush.msra.mxu0 %v108
    %1090 = vmatpush.msra.mxu0 %v104
    %1091 = vmatpush.msra.mxu0 %v100
    %1092 = vmatpush.msra.mxu0 %v96
    %1093 = vmatpush.msra.mxu0 %v92
    %1094 = vmatpush.msra.mxu0 %v88
    %1095 = vmatpush.msra.mxu0 %v84
    %1096 = vmatpush.msra.mxu0 %v80
    %1097 = vmatpush.msra.mxu0 %v76
    %1098 = vmatpush.msra.mxu0 %v72
    %1099 = vmatpush.msra.mxu0 %v68
    %1100 = vmatpush.msra.mxu0 %v64
    %1101 = vmatpush.msra.mxu0 %v60
    %1102 = vmatpush.msra.mxu0 %v56
    %1103 = vmatmul.f32.gmra.mxu0 %v1039
    %v1104 = vpop.f32.mrf.mxu0
    %v1105 = vadd.f32 0.0, %v1104
    %1106 = vdwg.mxu0
    %1107 = vmatpush.msra.mxu0 %v117
    %1108 = vmatpush.msra.mxu0 %v113
    %1109 = vmatpush.msra.mxu0 %v109
    %1110 = vmatpush.msra.mxu0 %v105
    %1111 = vmatpush.msra.mxu0 %v101
    %1112 = vmatpush.msra.mxu0 %v97
    %1113 = vmatpush.msra.mxu0 %v93
    %1114 = vmatpush.msra.mxu0 %v89
    %1115 = vmatpush.msra.mxu0 %v85
    %1116 = vmatpush.msra.mxu0 %v81
    %1117 = vmatpush.msra.mxu0 %v77
    %1118 = vmatpush.msra.mxu0 %v73
    %1119 = vmatpush.msra.mxu0 %v69
    %1120 = vmatpush.msra.mxu0 %v65
    %1121 = vmatpush.msra.mxu0 %v61
    %1122 = vmatpush.msra.mxu0 %v57
    %1123 = vmatmul.f32.gmra.mxu0 %v1039
    %v1124 = vpop.f32.mrf.mxu0
    %v1125 = vadd.f32 0.0, %v1124
    %1126 = vdwg.mxu0
    %v1127 = vadd.f32 %v1043, %v1065
    %v1128 = vadd.f32 %v1044, %v1085
    %v1129 = vadd.f32 %v1045, %v1105
    %v1130 = vadd.f32 %v1046, %v1125
    %v1131 = vxor.u32 %v1127, 2147483648
    %v1132 = vmul.f32 %v1131, 1.442695
    %v1133 = vpow.pop %v1132
    %v1134 = vadd.f32 %v1133, 1.0
    %v1135 = vrcp.pop %v1134
    %v1136 = vmul.f32 %v1134, %v1135
    %v1137 = vsub.f32 1.0, %v1136
    %v1138 = vmul.f32 %v1135, %v1137
    %v1139 = vadd.f32 %v1135, %v1138
    %vm1140 = vweird.f32 %v1134
    %vm1141 = vweird.f32 %v1135
    %vm1142 = vmor %vm1140, %vm1141
    %v1143 = vsel %vm1142, %v1135, %v1139
    %v1144 = vand.u32 2147483647, %v1134
    %vm1145 = vcmp.eq.f32.partialorder %v1144, 8.507059e+37
    %v1146 = vand.u32 %v1134, 2147483648
    %v1147 = vor.u32 1.1754944e-38, %v1146
    %v1148 = vsel %vm1145, %v1147, %v1143
    %v1149 = vmul.f32 1.0, %v1148
    %v1150 = vxor.u32 %v1128, 2147483648
    %v1151 = vmul.f32 %v1150, 1.442695
    %v1152 = vpow.pop %v1151
    %v1153 = vadd.f32 %v1152, 1.0
    %v1154 = vrcp.pop %v1153
    %v1155 = vmul.f32 %v1153, %v1154
    %v1156 = vsub.f32 1.0, %v1155
    %v1157 = vmul.f32 %v1154, %v1156
    %v1158 = vadd.f32 %v1154, %v1157
    %vm1159 = vweird.f32 %v1153
    %vm1160 = vweird.f32 %v1154
    %vm1161 = vmor %vm1159, %vm1160
    %v1162 = vsel %vm1161, %v1154, %v1158
    %v1163 = vand.u32 2147483647, %v1153
    %vm1164 = vcmp.eq.f32.partialorder %v1163, 8.507059e+37
    %v1165 = vand.u32 %v1153, 2147483648
    %v1166 = vor.u32 1.1754944e-38, %v1165
    %v1167 = vsel %vm1164, %v1166, %v1162
    %v1168 = vmul.f32 1.0, %v1167
    %v1169 = vtanh.pop %v1129
    %v1170 = vxor.u32 %v1130, 2147483648
    %v1171 = vmul.f32 %v1170, 1.442695
    %v1172 = vpow.pop %v1171
    %v1173 = vadd.f32 %v1172, 1.0
    %v1174 = vrcp.pop %v1173
    %v1175 = vmul.f32 %v1173, %v1174
    %v1176 = vsub.f32 1.0, %v1175
    %v1177 = vmul.f32 %v1174, %v1176
    %v1178 = vadd.f32 %v1174, %v1177
    %vm1179 = vweird.f32 %v1173
    %vm1180 = vweird.f32 %v1174
    %vm1181 = vmor %vm1179, %vm1180
    %v1182 = vsel %vm1181, %v1174, %v1178
    %v1183 = vand.u32 2147483647, %v1173
    %vm1184 = vcmp.eq.f32.partialorder %v1183, 8.507059e+37
    %v1185 = vand.u32 %v1173, 2147483648
    %v1186 = vor.u32 1.1754944e-38, %v1185
    %v1187 = vsel %vm1184, %v1186, %v1182
    %v1188 = vmul.f32 1.0, %v1187
    %v1189 = vmul.f32 %v1168, %v1037
    %v1190 = vmul.f32 %v1149, %v1169
    %v1191 = vadd.f32 %v1189, %v1190
    %v1192 = vtanh.pop %v1191
    %v1193 = vmul.f32 %v1188, %v1192
    %s1194 = scalar_lea.vmem [#allocation9], 48
    %1195 = vst [vmem:[%s1194] sm:$0xff] %v1193
    %s1196 = scalar_lea.vmem [#allocation4], 224
    %v1197 = vld [vmem:[%s1196] sm:$0xff]
    %v1198 = vld [vmem:[%s1196 + $0x8] sm:$0xff]
    %v1199 = vld [vmem:[%s1196 + $0x10] sm:$0xff]
    %v1200 = vld [vmem:[%s1196 + $0x18] sm:$0xff]
    %1201 = vmatpush.msra.mxu0 %v114
    %1202 = vmatpush.msra.mxu0 %v110
    %1203 = vmatpush.msra.mxu0 %v106
    %1204 = vmatpush.msra.mxu0 %v102
    %1205 = vmatpush.msra.mxu0 %v98
    %1206 = vmatpush.msra.mxu0 %v94
    %1207 = vmatpush.msra.mxu0 %v90
    %1208 = vmatpush.msra.mxu0 %v86
    %1209 = vmatpush.msra.mxu0 %v82
    %1210 = vmatpush.msra.mxu0 %v78
    %1211 = vmatpush.msra.mxu0 %v74
    %1212 = vmatpush.msra.mxu0 %v70
    %1213 = vmatpush.msra.mxu0 %v66
    %1214 = vmatpush.msra.mxu0 %v62
    %1215 = vmatpush.msra.mxu0 %v58
    %1216 = vmatpush.msra.mxu0 %v54
    %1217 = vmatmul.f32.gmra.mxu0 %v1193
    %v1218 = vpop.f32.mrf.mxu0
    %v1219 = vadd.f32 0.0, %v1218
    %1220 = vdwg.mxu0
    %1221 = vmatpush.msra.mxu0 %v115
    %1222 = vmatpush.msra.mxu0 %v111
    %1223 = vmatpush.msra.mxu0 %v107
    %1224 = vmatpush.msra.mxu0 %v103
    %1225 = vmatpush.msra.mxu0 %v99
    %1226 = vmatpush.msra.mxu0 %v95
    %1227 = vmatpush.msra.mxu0 %v91
    %1228 = vmatpush.msra.mxu0 %v87
    %1229 = vmatpush.msra.mxu0 %v83
    %1230 = vmatpush.msra.mxu0 %v79
    %1231 = vmatpush.msra.mxu0 %v75
    %1232 = vmatpush.msra.mxu0 %v71
    %1233 = vmatpush.msra.mxu0 %v67
    %1234 = vmatpush.msra.mxu0 %v63
    %1235 = vmatpush.msra.mxu0 %v59
    %1236 = vmatpush.msra.mxu0 %v55
    %1237 = vmatmul.f32.gmra.mxu0 %v1193
    %v1238 = vpop.f32.mrf.mxu0
    %v1239 = vadd.f32 0.0, %v1238
    %1240 = vdwg.mxu0
    %1241 = vmatpush.msra.mxu0 %v116
    %1242 = vmatpush.msra.mxu0 %v112
    %1243 = vmatpush.msra.mxu0 %v108
    %1244 = vmatpush.msra.mxu0 %v104
    %1245 = vmatpush.msra.mxu0 %v100
    %1246 = vmatpush.msra.mxu0 %v96
    %1247 = vmatpush.msra.mxu0 %v92
    %1248 = vmatpush.msra.mxu0 %v88
    %1249 = vmatpush.msra.mxu0 %v84
    %1250 = vmatpush.msra.mxu0 %v80
    %1251 = vmatpush.msra.mxu0 %v76
    %1252 = vmatpush.msra.mxu0 %v72
    %1253 = vmatpush.msra.mxu0 %v68
    %1254 = vmatpush.msra.mxu0 %v64
    %1255 = vmatpush.msra.mxu0 %v60
    %1256 = vmatpush.msra.mxu0 %v56
    %1257 = vmatmul.f32.gmra.mxu0 %v1193
    %v1258 = vpop.f32.mrf.mxu0
    %v1259 = vadd.f32 0.0, %v1258
    %1260 = vdwg.mxu0
    %1261 = vmatpush.msra.mxu0 %v117
    %1262 = vmatpush.msra.mxu0 %v113
    %1263 = vmatpush.msra.mxu0 %v109
    %1264 = vmatpush.msra.mxu0 %v105
    %1265 = vmatpush.msra.mxu0 %v101
    %1266 = vmatpush.msra.mxu0 %v97
    %1267 = vmatpush.msra.mxu0 %v93
    %1268 = vmatpush.msra.mxu0 %v89
    %1269 = vmatpush.msra.mxu0 %v85
    %1270 = vmatpush.msra.mxu0 %v81
    %1271 = vmatpush.msra.mxu0 %v77
    %1272 = vmatpush.msra.mxu0 %v73
    %1273 = vmatpush.msra.mxu0 %v69
    %1274 = vmatpush.msra.mxu0 %v65
    %1275 = vmatpush.msra.mxu0 %v61
    %1276 = vmatpush.msra.mxu0 %v57
    %1277 = vmatmul.f32.gmra.mxu0 %v1193
    %v1278 = vpop.f32.mrf.mxu0
    %v1279 = vadd.f32 0.0, %v1278
    %1280 = vdwg.mxu0
    %v1281 = vadd.f32 %v1197, %v1219
    %v1282 = vadd.f32 %v1198, %v1239
    %v1283 = vadd.f32 %v1199, %v1259
    %v1284 = vadd.f32 %v1200, %v1279
    %v1285 = vxor.u32 %v1281, 2147483648
    %v1286 = vmul.f32 %v1285, 1.442695
    %v1287 = vpow.pop %v1286
    %v1288 = vadd.f32 %v1287, 1.0
    %v1289 = vrcp.pop %v1288
    %v1290 = vmul.f32 %v1288, %v1289
    %v1291 = vsub.f32 1.0, %v1290
    %v1292 = vmul.f32 %v1289, %v1291
    %v1293 = vadd.f32 %v1289, %v1292
    %vm1294 = vweird.f32 %v1288
    %vm1295 = vweird.f32 %v1289
    %vm1296 = vmor %vm1294, %vm1295
    %v1297 = vsel %vm1296, %v1289, %v1293
    %v1298 = vand.u32 2147483647, %v1288
    %vm1299 = vcmp.eq.f32.partialorder %v1298, 8.507059e+37
    %v1300 = vand.u32 %v1288, 2147483648
    %v1301 = vor.u32 1.1754944e-38, %v1300
    %v1302 = vsel %vm1299, %v1301, %v1297
    %v1303 = vmul.f32 1.0, %v1302
    %v1304 = vxor.u32 %v1282, 2147483648
    %v1305 = vmul.f32 %v1304, 1.442695
    %v1306 = vpow.pop %v1305
    %v1307 = vadd.f32 %v1306, 1.0
    %v1308 = vrcp.pop %v1307
    %v1309 = vmul.f32 %v1307, %v1308
    %v1310 = vsub.f32 1.0, %v1309
    %v1311 = vmul.f32 %v1308, %v1310
    %v1312 = vadd.f32 %v1308, %v1311
    %vm1313 = vweird.f32 %v1307
    %vm1314 = vweird.f32 %v1308
    %vm1315 = vmor %vm1313, %vm1314
    %v1316 = vsel %vm1315, %v1308, %v1312
    %v1317 = vand.u32 2147483647, %v1307
    %vm1318 = vcmp.eq.f32.partialorder %v1317, 8.507059e+37
    %v1319 = vand.u32 %v1307, 2147483648
    %v1320 = vor.u32 1.1754944e-38, %v1319
    %v1321 = vsel %vm1318, %v1320, %v1316
    %v1322 = vmul.f32 1.0, %v1321
    %v1323 = vtanh.pop %v1283
    %v1324 = vxor.u32 %v1284, 2147483648
    %v1325 = vmul.f32 %v1324, 1.442695
    %v1326 = vpow.pop %v1325
    %v1327 = vadd.f32 %v1326, 1.0
    %v1328 = vrcp.pop %v1327
    %v1329 = vmul.f32 %v1327, %v1328
    %v1330 = vsub.f32 1.0, %v1329
    %v1331 = vmul.f32 %v1328, %v1330
    %v1332 = vadd.f32 %v1328, %v1331
    %vm1333 = vweird.f32 %v1327
    %vm1334 = vweird.f32 %v1328
    %vm1335 = vmor %vm1333, %vm1334
    %v1336 = vsel %vm1335, %v1328, %v1332
    %v1337 = vand.u32 2147483647, %v1327
    %vm1338 = vcmp.eq.f32.partialorder %v1337, 8.507059e+37
    %v1339 = vand.u32 %v1327, 2147483648
    %v1340 = vor.u32 1.1754944e-38, %v1339
    %v1341 = vsel %vm1338, %v1340, %v1336
    %v1342 = vmul.f32 1.0, %v1341
    %v1343 = vmul.f32 %v1322, %v1191
    %v1344 = vmul.f32 %v1303, %v1323
    %v1345 = vadd.f32 %v1343, %v1344
    %v1346 = vtanh.pop %v1345
    %v1347 = vmul.f32 %v1342, %v1346
    %s1348 = scalar_lea.vmem [#allocation9], 56
    %1349 = vst [vmem:[%s1348] sm:$0xff] %v1347
    %1350 = vst [vmem:[#allocation2] sm:$0xff] %v1347
    %1351 = vst [vmem:[#allocation3] sm:$0xff] %v1345
    // Predicated region
    $region22: #{tpu_custom_call.1} parent=1 // pred_check
      %p1352 = pneg %p48
    $region23: #{tpu_custom_call.1} parent=1 // pred_check_branch
      %1354 = sbr.rel (%p1352) target = $region25
    $region24: #{tpu_custom_call.1} parent=1 // pred_region
      %1355 = vst [vmem:[#allocation10] sm:$0xff] %v1347
      %1356 = vst [vmem:[#allocation12] sm:$0xff] %v1345
    $region25: #{tpu_custom_call.1} parent=1 // pred_fallthru
      _
    // Predicated region
    $region26: #{tpu_custom_call.1} parent=1 // pred_check
      _
    $region27: #{tpu_custom_call.1} parent=1 // pred_check_branch
      %1358 = sbr.rel (0) target = $region29
    $region28: #{tpu_custom_call.1} parent=1 // pred_region
      %1360 = vsyncadd [#allocation6], 0
      %s1361 = sshll.u32 [#allocation9], 4
      %s1362 = int_to_ptr.vmem [resolvable:$true] %s1361
      %s1363 = sshll.u32 %s2, 4
      %s1364 = int_to_ptr.hbm [resolvable:$true] %s1363
      %1369 = dma.vmem_to_hbm [thread:$0]  %s1362, 1024, %s1364, [#allocation6], 128, 128, 8
    $region29: #{tpu_custom_call.1} parent=1 // pred_fallthru
      _
    // Predicated region
    $region30: #{tpu_custom_call.1} parent=1 // pred_check
      _
    $region31: #{tpu_custom_call.1} parent=1 // pred_check_branch
      %1371 = sbr.rel (0) target = $region33
    $region32: #{tpu_custom_call.1} parent=1 // pred_region
      %1373 = vsyncadd [#allocation11], 0
      %s1375 = sshll.u32 [#allocation10], 4
      %s1376 = int_to_ptr.vmem [resolvable:$true] %s1375
      %s1377 = sshll.u32 %s3, 4
      %s1378 = int_to_ptr.hbm [resolvable:$true] %s1377
      %1380 = dma.vmem_to_hbm [thread:$0]  %s1376, 128, %s1378, [#allocation11]
    $region33: #{tpu_custom_call.1} parent=1 // pred_fallthru
      _
    // Predicated region
    $region34: #{tpu_custom_call.1} parent=1 // pred_check
      _
    $region35: #{tpu_custom_call.1} parent=1 // pred_check_branch
      %1382 = sbr.rel (0) target = $region37
    $region36: #{tpu_custom_call.1} parent=1 // pred_region
      %1384 = vsyncadd [#allocation11], 0
      %s1386 = sshll.u32 [#allocation12], 4
      %s1387 = int_to_ptr.vmem [resolvable:$true] %s1386
      %s1388 = sshll.u32 %s4, 4
      %s1389 = int_to_ptr.hbm [resolvable:$true] %s1388
      %1391 = dma.vmem_to_hbm [thread:$0]  %s1387, 128, %s1389, [#allocation11]
    $region37: #{tpu_custom_call.1} parent=1 // pred_fallthru
      _
    // Predicated region
    $region38: #{tpu_custom_call.1} parent=1 // pred_check
      _
    $region39: #{tpu_custom_call.1} parent=1 // pred_check_branch
      %1393 = sbr.rel (0) target = $region41
    $region40: #{tpu_custom_call.1} parent=1 // pred_region
      %1395 = dma.done [#allocation6], 1024
    $region41: #{tpu_custom_call.1} parent=1 // pred_fallthru
      _
    // Predicated region
    $region42: #{tpu_custom_call.1} parent=1 // pred_check
      _
    $region43: #{tpu_custom_call.1} parent=1 // pred_check_branch
      %1397 = sbr.rel (0) target = $region45
    $region44: #{tpu_custom_call.1} parent=1 // pred_region
      %1399 = dma.done [#allocation11], 128
    $region45: #{tpu_custom_call.1} parent=1 // pred_fallthru
      _
    // Predicated region
    $region46: #{tpu_custom_call.1} parent=1 // pred_check
      _
    $region47: #{tpu_custom_call.1} parent=1 // pred_check_branch
      %1401 = sbr.rel (0) target = $region49
    $region48: #{tpu_custom_call.1} parent=1 // pred_region
      %1403 = dma.done [#allocation11], 128
    $region49: #{tpu_custom_call.1} parent=1 // pred_fallthru
      _
    %1404 = vsyncpa [#allocation5], 1
    %1405 = vsyncpa [#allocation8], 1
    %1406 = vsyncpa [#allocation6], 1
    %1407 = vsyncpa [#allocation11], 1

</llo_original>
